<compile_context>
chip_gen: v5e
topology: v5e:2x2
jax: 0.10.0
libtpu: 0.0.40
codegen_flags: <defaults>
</compile_context>

<pallas_src>
import functools

import jax
import jax.numpy as jnp
from jax.experimental import pallas as pl
from jax.experimental.pallas import tpu as pltpu


def _round_up(x, m):
    return ((x + m - 1) // m) * m


def get_layer_sizes(input_dim, output_dim, env_size):
    sizes = {
        4: [input_dim, 256, 512, 512, 256, output_dim],
        5: [input_dim, 512, 1024, 512, 256, output_dim],
        6: [input_dim, 512, 1024, 2048, 1024, 512, 256, output_dim],
        7: [input_dim, 512, 1024, 2048, 1024, 512, 256, output_dim],
        8: [input_dim, 512, 1024, 1024, 1024, 1024, 512, output_dim],
    }
    return sizes.get(env_size, sizes[4])


def init_dqn_params(key, input_dim, output_dim, env_size):
    """PyTorch nn.Linear default init: U[-1/sqrt(fan_in), +1/sqrt(fan_in)].
    Weights stored as (D_in, D_out) so y = x @ W + b."""
    layer_sizes = get_layer_sizes(input_dim, output_dim, env_size)
    params = []
    for i in range(len(layer_sizes) - 1):
        d_in, d_out = layer_sizes[i], layer_sizes[i + 1]
        key, kw, kb = jax.random.split(key, 3)
        bound = 1.0 / (d_in ** 0.5)
        w = jax.random.uniform(kw, (d_in, d_out), jnp.float32, -bound, bound)
        b = jax.random.uniform(kb, (d_out,), jnp.float32, -bound, bound)
        params.append((w, b))
    return params


def prepare_params(params, input_dim, output_dim):
    """Pad first-layer rows / last-layer cols to multiples of 128 (zeros),
    cast weights to bf16 (weight-HBM-bandwidth bound at small batch), and
    concatenate all biases into one (1, sum(d_out)) f32 array."""
    d0_pad = _round_up(input_dim, 128)
    dl_pad = _round_up(output_dim, 128)
    dims = [d0_pad] + [w.shape[1] for w, _ in params[:-1]] + [dl_pad]
    num_layers = len(params)
    ws, bias_parts = [], []
    for l, (w, b) in enumerate(params):
        if l == 0:
            w = jnp.pad(w, ((0, d0_pad - w.shape[0]), (0, 0)))
        if l == num_layers - 1:
            w = jnp.pad(w, ((0, 0), (0, dl_pad - w.shape[1])))
            b = jnp.pad(b, (0, dl_pad - b.shape[0]))
        # TODO(synk): per-chip weight quantization (int8 on v5e/v6e, fp8 on
        # v7x via pltpu.get_tpu_info()) would halve the weight stream again.
        ws.append(w.astype(jnp.bfloat16))
        bias_parts.append(b.astype(jnp.float32))
    b_cat = jnp.concatenate(bias_parts).reshape(1, -1)  # (1, sum(d_out)), f32
    return ws, b_cat, dims, output_dim


def _fused_mlp_kernel(*refs, dims):
    """refs = (x, w0, w1, ..., w_{L-1}, bias_cat, out).

    Fully unrolled over layers (static shapes).  All weights are VMEM-resident
    inputs; biases are one concatenated f32 row sliced statically per layer
    (every offset is a multiple of 128, so slices are lane-aligned views)."""
    num_layers = len(dims) - 1
    x_ref = refs[0]
    w_refs = refs[1:1 + num_layers]
    b_ref = refs[1 + num_layers]
    o_ref = refs[2 + num_layers]

    h = x_ref[...]  # (B_pad, dims[0]) f32, stays on-chip throughout
    off = 0
    for l in range(num_layers):
        d_out = dims[l + 1]
        y = jnp.dot(
            h.astype(jnp.bfloat16),
            w_refs[l][...],
            preferred_element_type=jnp.float32,
        )
        y = y + b_ref[:, off:off + d_out]  # (1, d_out) broadcast over batch
        off += d_out
        h = jnp.maximum(y, 0.0) if l + 1 < num_layers else y

    o_ref[...] = h.astype(o_ref.dtype)


def dqn_forward(prepared, x):
    ws, b_cat, dims, out_dim = prepared
    num_layers = len(ws)
    batch, d_in_logical = x.shape
    # bf16 vregs pack [16,128]; pad batch to 16 so the bf16 casts of the
    # activations feed the MXU with full packed sublanes.
    b_pad = _round_up(max(batch, 16), 16)
    x_pad = jnp.pad(
        x.astype(jnp.float32),
        ((0, b_pad - batch), (0, dims[0] - d_in_logical)),
    )

    vmem_spec = pl.BlockSpec(memory_space=pltpu.MemorySpace.VMEM)
    in_specs = [vmem_spec] + [vmem_spec] * num_layers + [vmem_spec]
    inputs = [x_pad] + list(ws) + [b_cat]

    # VMEM budget: resident bf16 weights + biases + I/O + f32 activations of
    # every layer (the unrolled Python loop keeps them all live) + bf16 casts.
    weight_bytes = sum(w.size for w in ws) * 2
    bias_bytes = b_cat.size * 4
    io_bytes = (x_pad.size + b_pad * dims[-1]) * 4
    act_bytes = b_pad * sum(dims) * (4 + 2)
    needed = weight_bytes + bias_bytes + io_bytes + act_bytes
    # Floor at 32 MiB, keep headroom under v7x's 64 MiB physical budget.
    vmem_limit = int(min(max(needed + (16 << 20), 32 << 20), 48 << 20))

    out = pl.pallas_call(
        functools.partial(_fused_mlp_kernel, dims=tuple(dims)),
        out_shape=jax.ShapeDtypeStruct((b_pad, dims[-1]), jnp.float32),
        in_specs=in_specs,
        out_specs=vmem_spec,
        compiler_params=pltpu.CompilerParams(vmem_limit_bytes=vmem_limit),
    )(*inputs)

    # TODO(synk): v7x could shard each layer's d_out across its 2 TensorCores
    # (pl.core_map + VMEM_SHARED activation exchange) to halve per-core weight
    # traffic; single-core fused here.
    # TODO(synk): for training batch sizes (B >= 128) add a "parallel" batch
    # grid axis with 128-256-row blocks instead of one whole-batch block.
    return out[:batch, :out_dim]


def dqn_forward_ref_matched(prepared, x):
    """Same numerics as the kernel (bf16 weights/activations, f32 accumulation)."""
    ws, b_cat, dims, out_dim = prepared
    num_layers = len(ws)
    h = jnp.pad(x.astype(jnp.float32), ((0, 0), (0, dims[0] - x.shape[1])))
    off = 0
    for l, w in enumerate(ws):
        d_out = dims[l + 1]
        y = jnp.dot(h.astype(jnp.bfloat16), w, preferred_element_type=jnp.float32)
        y = y + b_cat[:, off:off + d_out]
        off += d_out
        h = jnp.maximum(y, 0.0) if l + 1 < num_layers else y
    return h[:, :out_dim]


def dqn_forward_ref_f32(params, x):
    """Full-f32 reference matching the PyTorch module."""
    h = x
    for w, b in params[:-1]:
        h = jnp.maximum(h @ w + b, 0.0)
    w, b = params[-1]
    return h @ w + b


if __name__ == "__main__":
    input_dim = 32
    output_dim = 8
    env_size = 4
    batch = 2

    key = jax.random.PRNGKey(0)
    key, kx = jax.random.split(key)
    params = init_dqn_params(key, input_dim, output_dim, env_size)
    prepared = prepare_params(params, input_dim, output_dim)
    x = jax.random.normal(kx, (batch, input_dim), jnp.float32)

    fwd = jax.jit(lambda xx: dqn_forward(prepared, xx))
    out = jax.block_until_ready(fwd(x))

    ref_bf16 = jax.block_until_ready(dqn_forward_ref_matched(prepared, x))
    ref_f32 = jax.block_until_ready(dqn_forward_ref_f32(params, x))

    assert out.shape == (batch, output_dim), out.shape
    # Exact-contract check: kernel vs identical bf16-input / f32-accum math in XLA.
    assert jnp.allclose(out, ref_bf16, atol=1e-2, rtol=1e-2), (out, ref_bf16)
    # Semantics check vs the full-f32 PyTorch-equivalent forward (bf16 weight
    # storage introduces ~1e-2-scale differences).
    assert jnp.allclose(out, ref_f32, atol=1e-1, rtol=1e-1), (out, ref_f32)
    print("KERNEL_OK")
</pallas_src>

<mosaic_0001>
module attributes {stable_mosaic.version = 11 : i64} {
  func.func @_fused_mlp_kernel(%arg0: memref<16x128xf32, #tpu.memory_space<vmem>>, %arg1: memref<128x256xbf16, #tpu.memory_space<vmem>>, %arg2: memref<256x512xbf16, #tpu.memory_space<vmem>>, %arg3: memref<512x512xbf16, #tpu.memory_space<vmem>>, %arg4: memref<512x256xbf16, #tpu.memory_space<vmem>>, %arg5: memref<256x128xbf16, #tpu.memory_space<vmem>>, %arg6: memref<1x1664xf32, #tpu.memory_space<vmem>>, %arg7: memref<16x128xf32, #tpu.memory_space<vmem>>) attributes {dimension_semantics = [], scalar_prefetch = 0 : i64, scratch_operands = 0 : i64, tpu.core_type = #tpu.core_type<tc>} {
    %c0 = arith.constant 0 : index
    %c0_0 = arith.constant 0 : index
    %0 = vector.load %arg0[%c0, %c0_0] : memref<16x128xf32, #tpu.memory_space<vmem>>, vector<16x128xf32>
    %1 = arith.truncf %0 : vector<16x128xf32> to vector<16x128xbf16>
    %c0_1 = arith.constant 0 : index
    %c0_2 = arith.constant 0 : index
    %2 = vector.load %arg1[%c0_1, %c0_2] : memref<128x256xbf16, #tpu.memory_space<vmem>>, vector<128x256xbf16>
    %cst = arith.constant dense<0.000000e+00> : vector<16x256xf32>
    %3 = tpu.matmul %1, %2, %cst {dimension_numbers = #tpu.dot_dimension_numbers<[1], [0], [0], [1], [0, 0, 1, 1], [], []>} : vector<16x128xbf16>, vector<128x256xbf16>, vector<16x256xf32> -> vector<16x256xf32>
    %c0_3 = arith.constant 0 : index
    %c0_4 = arith.constant 0 : index
    %4 = vector.load %arg6[%c0_3, %c0_4] : memref<1x1664xf32, #tpu.memory_space<vmem>>, vector<1x256xf32>
    %5 = vector.broadcast %4 : vector<1x256xf32> to vector<16x256xf32>
    %6 = arith.addf %3, %5 : vector<16x256xf32>
    %cst_5 = arith.constant 0.000000e+00 : f32
    %7 = vector.broadcast %cst_5 : f32 to vector<16x256xf32>
    %8 = arith.maximumf %6, %7 : vector<16x256xf32>
    %9 = arith.truncf %8 : vector<16x256xf32> to vector<16x256xbf16>
    %c0_6 = arith.constant 0 : index
    %c0_7 = arith.constant 0 : index
    %10 = vector.load %arg2[%c0_6, %c0_7] : memref<256x512xbf16, #tpu.memory_space<vmem>>, vector<256x512xbf16>
    %cst_8 = arith.constant dense<0.000000e+00> : vector<16x512xf32>
    %11 = tpu.matmul %9, %10, %cst_8 {dimension_numbers = #tpu.dot_dimension_numbers<[1], [0], [0], [1], [0, 0, 1, 1], [], []>} : vector<16x256xbf16>, vector<256x512xbf16>, vector<16x512xf32> -> vector<16x512xf32>
    %c0_9 = arith.constant 0 : index
    %c256 = arith.constant 256 : index
    %12 = vector.load %arg6[%c0_9, %c256] : memref<1x1664xf32, #tpu.memory_space<vmem>>, vector<1x512xf32>
    %13 = vector.broadcast %12 : vector<1x512xf32> to vector<16x512xf32>
    %14 = arith.addf %11, %13 : vector<16x512xf32>
    %cst_10 = arith.constant 0.000000e+00 : f32
    %15 = vector.broadcast %cst_10 : f32 to vector<16x512xf32>
    %16 = arith.maximumf %14, %15 : vector<16x512xf32>
    %17 = arith.truncf %16 : vector<16x512xf32> to vector<16x512xbf16>
    %c0_11 = arith.constant 0 : index
    %c0_12 = arith.constant 0 : index
    %18 = vector.load %arg3[%c0_11, %c0_12] : memref<512x512xbf16, #tpu.memory_space<vmem>>, vector<512x512xbf16>
    %cst_13 = arith.constant dense<0.000000e+00> : vector<16x512xf32>
    %19 = tpu.matmul %17, %18, %cst_13 {dimension_numbers = #tpu.dot_dimension_numbers<[1], [0], [0], [1], [0, 0, 1, 1], [], []>} : vector<16x512xbf16>, vector<512x512xbf16>, vector<16x512xf32> -> vector<16x512xf32>
    %c0_14 = arith.constant 0 : index
    %c768 = arith.constant 768 : index
    %20 = vector.load %arg6[%c0_14, %c768] : memref<1x1664xf32, #tpu.memory_space<vmem>>, vector<1x512xf32>
    %21 = vector.broadcast %20 : vector<1x512xf32> to vector<16x512xf32>
    %22 = arith.addf %19, %21 : vector<16x512xf32>
    %cst_15 = arith.constant 0.000000e+00 : f32
    %23 = vector.broadcast %cst_15 : f32 to vector<16x512xf32>
    %24 = arith.maximumf %22, %23 : vector<16x512xf32>
    %25 = arith.truncf %24 : vector<16x512xf32> to vector<16x512xbf16>
    %c0_16 = arith.constant 0 : index
    %c0_17 = arith.constant 0 : index
    %26 = vector.load %arg4[%c0_16, %c0_17] : memref<512x256xbf16, #tpu.memory_space<vmem>>, vector<512x256xbf16>
    %cst_18 = arith.constant dense<0.000000e+00> : vector<16x256xf32>
    %27 = tpu.matmul %25, %26, %cst_18 {dimension_numbers = #tpu.dot_dimension_numbers<[1], [0], [0], [1], [0, 0, 1, 1], [], []>} : vector<16x512xbf16>, vector<512x256xbf16>, vector<16x256xf32> -> vector<16x256xf32>
    %c0_19 = arith.constant 0 : index
    %c1280 = arith.constant 1280 : index
    %28 = vector.load %arg6[%c0_19, %c1280] : memref<1x1664xf32, #tpu.memory_space<vmem>>, vector<1x256xf32>
    %29 = vector.broadcast %28 : vector<1x256xf32> to vector<16x256xf32>
    %30 = arith.addf %27, %29 : vector<16x256xf32>
    %cst_20 = arith.constant 0.000000e+00 : f32
    %31 = vector.broadcast %cst_20 : f32 to vector<16x256xf32>
    %32 = arith.maximumf %30, %31 : vector<16x256xf32>
    %33 = arith.truncf %32 : vector<16x256xf32> to vector<16x256xbf16>
    %c0_21 = arith.constant 0 : index
    %c0_22 = arith.constant 0 : index
    %34 = vector.load %arg5[%c0_21, %c0_22] : memref<256x128xbf16, #tpu.memory_space<vmem>>, vector<256x128xbf16>
    %cst_23 = arith.constant dense<0.000000e+00> : vector<16x128xf32>
    %35 = tpu.matmul %33, %34, %cst_23 {dimension_numbers = #tpu.dot_dimension_numbers<[1], [0], [0], [1], [0, 0, 1, 1], [], []>} : vector<16x256xbf16>, vector<256x128xbf16>, vector<16x128xf32> -> vector<16x128xf32>
    %c0_24 = arith.constant 0 : index
    %c1536 = arith.constant 1536 : index
    %36 = vector.load %arg6[%c0_24, %c1536] : memref<1x1664xf32, #tpu.memory_space<vmem>>, vector<1x128xf32>
    %37 = vector.broadcast %36 : vector<1x128xf32> to vector<16x128xf32>
    %38 = arith.addf %35, %37 : vector<16x128xf32>
    %c0_25 = arith.constant 0 : index
    %c0_26 = arith.constant 0 : index
    %39 = vector.load %arg7[%c0_25, %c0_26] : memref<16x128xf32, #tpu.memory_space<vmem>>, vector<16x128xf32>
    tpu.vector_store %arg7[%c0_25, %c0_26], %38 {strides = array<i32>} : memref<16x128xf32, #tpu.memory_space<vmem>>, vector<16x128xf32>,
    return
  }
}

</mosaic_0001>

<llo_original>
// kernel: _lambda_.1
$region0: #{_lambda_.1}
  #allocation0 [shape = 'u32[]', space=smem, size = 0x4, offset = 0x4, fixed_abs, tag = 'smem constant byte address 0x4 - core index']
  #allocation1 [shape = 'u32[72,128]{1,0:T(1,128)}', space=vmem, size = 0x9000, scoped, tag = 'internal scratch']
  %s0 = inlined_call_operand.vmem [shape: f32[16,128], index: 0, kind: input, shape index: {}]
  %s1 = inlined_call_operand.hbm [shape: bf16[128,256], index: 1, kind: input, shape index: {}]
  %s2 = inlined_call_operand.hbm [shape: bf16[256,512], index: 2, kind: input, shape index: {}]
  %s3 = inlined_call_operand.hbm [shape: bf16[512,512], index: 3, kind: input, shape index: {}]
  %s4 = inlined_call_operand.hbm [shape: bf16[512,256], index: 4, kind: input, shape index: {}]
  %s5 = inlined_call_operand.hbm [shape: bf16[256,128], index: 5, kind: input, shape index: {}]
  %s6 = inlined_call_operand.vmem [shape: f32[1,1664], index: 6, kind: input, shape index: {}]
  %s7 = inlined_call_operand.vmem [shape: f32[16,128], index: 7, kind: output, shape index: {}]
  %s8 = sld [smem:[#allocation0]]
  $region58: #{_lambda_.1} parent=0
    _
  %s10 = ssub.s32 1, %s8
  %s11 = scalar_select 0, %s10, %s8
  $region1: #{_lambda_.1} parent=0
    #allocation2 [shape = 'u8[65536]{0}', space=vmem, size = 0x10000, scoped, tag = 'input window, operand 1, single buffered']
    #allocation3 [shape = 's32[1]{0}', space=sflag, size = 0x4, scoped, tag = 'scoped memory for _lambda_.1']
    #allocation4 [shape = 'u8[262144]{0}', space=vmem, size = 0x40000, scoped, tag = 'input window, operand 2, single buffered']
    #allocation5 [shape = 's32[1]{0}', space=sflag, size = 0x4, scoped, tag = 'scoped memory for _lambda_.1']
    #allocation6 [shape = 'u8[524288]{0}', space=vmem, size = 0x80000, scoped, tag = 'input window, operand 3, single buffered']
    #allocation7 [shape = 'u8[262144]{0}', space=vmem, size = 0x40000, scoped, tag = 'input window, operand 4, single buffered']
    #allocation8 [shape = 's32[1]{0}', space=sflag, size = 0x4, scoped, tag = 'scoped memory for _lambda_.1']
    #allocation9 [shape = 'u8[65536]{0}', space=vmem, size = 0x10000, scoped, tag = 'input window, operand 5, single buffered']
    %12 = vsyncpa [#allocation3], 0
    %13 = vsyncpa [#allocation5], 0
    %14 = vsyncpa [#allocation8], 0
    // Predicated region
    $region2: #{_lambda_.1} parent=1 // pred_check
      _
    $region3: #{_lambda_.1} parent=1 // pred_check_branch
      %16 = sbr.rel (0) target = $region5
    $region4: #{_lambda_.1} parent=1 // pred_region
      _
    $region5: #{_lambda_.1} parent=1 // pred_fallthru
      _
    // Predicated region
    $region6: #{_lambda_.1} parent=1 // pred_check
      _
    $region7: #{_lambda_.1} parent=1 // pred_check_branch
      %18 = sbr.rel (0) target = $region9
    $region8: #{_lambda_.1} parent=1 // pred_region
      %20 = vsyncadd [#allocation3], 0
      %s21 = sshll.u32 %s1, 4
      %s22 = int_to_ptr.hbm [resolvable:$true] %s21
      %s23 = sshll.u32 [#allocation2], 4
      %s24 = int_to_ptr.vmem [resolvable:$true] %s23
      %29 = dma.hbm_to_vmem [thread:$0]  %s22, 2048, %s24, [#allocation3], 128, 128, 8
    $region9: #{_lambda_.1} parent=1 // pred_fallthru
      _
    // Predicated region
    $region10: #{_lambda_.1} parent=1 // pred_check
      _
    $region11: #{_lambda_.1} parent=1 // pred_check_branch
      %31 = sbr.rel (0) target = $region13
    $region12: #{_lambda_.1} parent=1 // pred_region
      %33 = vsyncadd [#allocation5], 0
      %s34 = sshll.u32 %s2, 4
      %s35 = int_to_ptr.hbm [resolvable:$true] %s34
      %s36 = sshll.u32 [#allocation4], 4
      %s37 = int_to_ptr.vmem [resolvable:$true] %s36
      %42 = dma.hbm_to_vmem [thread:$0]  %s35, 8192, %s37, [#allocation5], 256, 256, 16
    $region13: #{_lambda_.1} parent=1 // pred_fallthru
      _
    // Predicated region
    $region14: #{_lambda_.1} parent=1 // pred_check
      _
    $region15: #{_lambda_.1} parent=1 // pred_check_branch
      %44 = sbr.rel (0) target = $region17
    $region16: #{_lambda_.1} parent=1 // pred_region
      %46 = vsyncadd [#allocation5], 0
      %s47 = sshll.u32 %s3, 4
      %s48 = int_to_ptr.hbm [resolvable:$true] %s47
      %s49 = sshll.u32 [#allocation6], 4
      %s50 = int_to_ptr.vmem [resolvable:$true] %s49
      %55 = dma.hbm_to_vmem [thread:$0]  %s48, 16384, %s50, [#allocation5], 256, 256, 16
    $region17: #{_lambda_.1} parent=1 // pred_fallthru
      _
    // Predicated region
    $region18: #{_lambda_.1} parent=1 // pred_check
      _
    $region19: #{_lambda_.1} parent=1 // pred_check_branch
      %57 = sbr.rel (0) target = $region21
    $region20: #{_lambda_.1} parent=1 // pred_region
      %59 = vsyncadd [#allocation8], 0
      %s60 = sshll.u32 %s4, 4
      %s61 = int_to_ptr.hbm [resolvable:$true] %s60
      %s62 = sshll.u32 [#allocation7], 4
      %s63 = int_to_ptr.vmem [resolvable:$true] %s62
      %68 = dma.hbm_to_vmem [thread:$0]  %s61, 8192, %s63, [#allocation8], 128, 128, 8
    $region21: #{_lambda_.1} parent=1 // pred_fallthru
      _
    // Predicated region
    $region22: #{_lambda_.1} parent=1 // pred_check
      _
    $region23: #{_lambda_.1} parent=1 // pred_check_branch
      %70 = sbr.rel (0) target = $region25
    $region24: #{_lambda_.1} parent=1 // pred_region
      %72 = vsyncadd [#allocation8], 0
      %s73 = sshll.u32 %s5, 4
      %s74 = int_to_ptr.hbm [resolvable:$true] %s73
      %s75 = sshll.u32 [#allocation9], 4
      %s76 = int_to_ptr.vmem [resolvable:$true] %s75
      %81 = dma.hbm_to_vmem [thread:$0]  %s74, 2048, %s76, [#allocation8], 64, 64, 4
    $region25: #{_lambda_.1} parent=1 // pred_fallthru
      _
    // Predicated region
    $region26: #{_lambda_.1} parent=1 // pred_check
      _
    $region27: #{_lambda_.1} parent=1 // pred_check_branch
      %83 = sbr.rel (0) target = $region29
    $region28: #{_lambda_.1} parent=1 // pred_region
      _
    $region29: #{_lambda_.1} parent=1 // pred_fallthru
      _
    // Predicated region
    $region30: #{_lambda_.1} parent=1 // pred_check
      _
    $region31: #{_lambda_.1} parent=1 // pred_check_branch
      %85 = sbr.rel (0) target = $region33
    $region32: #{_lambda_.1} parent=1 // pred_region
      %87 = dma.done [#allocation3], 2048
    $region33: #{_lambda_.1} parent=1 // pred_fallthru
      _
    // Predicated region
    $region34: #{_lambda_.1} parent=1 // pred_check
      _
    $region35: #{_lambda_.1} parent=1 // pred_check_branch
      %89 = sbr.rel (0) target = $region37
    $region36: #{_lambda_.1} parent=1 // pred_region
      %91 = dma.done [#allocation5], 8192
    $region37: #{_lambda_.1} parent=1 // pred_fallthru
      _
    // Predicated region
    $region38: #{_lambda_.1} parent=1 // pred_check
      _
    $region39: #{_lambda_.1} parent=1 // pred_check_branch
      %93 = sbr.rel (0) target = $region41
    $region40: #{_lambda_.1} parent=1 // pred_region
      %95 = dma.done [#allocation5], 16384
    $region41: #{_lambda_.1} parent=1 // pred_fallthru
      _
    // Predicated region
    $region42: #{_lambda_.1} parent=1 // pred_check
      _
    $region43: #{_lambda_.1} parent=1 // pred_check_branch
      %97 = sbr.rel (0) target = $region45
    $region44: #{_lambda_.1} parent=1 // pred_region
      %99 = dma.done [#allocation8], 8192
    $region45: #{_lambda_.1} parent=1 // pred_fallthru
      _
    // Predicated region
    $region46: #{_lambda_.1} parent=1 // pred_check
      _
    $region47: #{_lambda_.1} parent=1 // pred_check_branch
      %101 = sbr.rel (0) target = $region49
    $region48: #{_lambda_.1} parent=1 // pred_region
      %103 = dma.done [#allocation8], 2048
    $region49: #{_lambda_.1} parent=1 // pred_fallthru
      _
    %v104 = vld [vmem:[%s0] sm:$0xff]
    %v105 = vld [vmem:[%s0 + $0x8] sm:$0xff]
    %v106 = vpack.c.bf16 %v105, %v104
    %v107 = vld [vmem:[#allocation2] sm:$0xff]
    %v108 = vld [vmem:[#allocation2 + $0x8] sm:$0xff]
    %v109 = vld [vmem:[#allocation2 + $0x10] sm:$0xff]
    %v110 = vld [vmem:[#allocation2 + $0x18] sm:$0xff]
    %v111 = vld [vmem:[#allocation2 + $0x20] sm:$0xff]
    %v112 = vld [vmem:[#allocation2 + $0x28] sm:$0xff]
    %v113 = vld [vmem:[#allocation2 + $0x30] sm:$0xff]
    %v114 = vld [vmem:[#allocation2 + $0x38] sm:$0xff]
    %v115 = vld [vmem:[#allocation2 + $0x40] sm:$0xff]
    %v116 = vld [vmem:[#allocation2 + $0x48] sm:$0xff]
    %v117 = vld [vmem:[#allocation2 + $0x50] sm:$0xff]
    %v118 = vld [vmem:[#allocation2 + $0x58] sm:$0xff]
    %v119 = vld [vmem:[#allocation2 + $0x60] sm:$0xff]
    %v120 = vld [vmem:[#allocation2 + $0x68] sm:$0xff]
    %v121 = vld [vmem:[#allocation2 + $0x70] sm:$0xff]
    %v122 = vld [vmem:[#allocation2 + $0x78] sm:$0xff]
    %v123 = vld [vmem:[%s6] sm:$0x3]
    %v125 = vperm.slane %v123, 0
    %v126 = vperm.slane %v123, 1
    %v145 = vunpack.c.l.b16 %v107
    %v146 = vunpack.c.h.b16 %v107
    %v147 = vunpack.c.l.b16 %v108
    %v148 = vunpack.c.h.b16 %v108
    %v149 = vunpack.c.l.b16 %v109
    %v150 = vunpack.c.h.b16 %v109
    %v151 = vunpack.c.l.b16 %v110
    %v152 = vunpack.c.h.b16 %v110
    %v153 = vunpack.c.l.b16 %v111
    %v154 = vunpack.c.h.b16 %v111
    %v155 = vunpack.c.l.b16 %v112
    %v156 = vunpack.c.h.b16 %v112
    %v157 = vunpack.c.l.b16 %v113
    %v158 = vunpack.c.h.b16 %v113
    %v159 = vunpack.c.l.b16 %v114
    %v160 = vunpack.c.h.b16 %v114
    %v161 = vunpack.c.l.b16 %v115
    %v162 = vunpack.c.h.b16 %v115
    %v163 = vunpack.c.l.b16 %v116
    %v164 = vunpack.c.h.b16 %v116
    %v165 = vunpack.c.l.b16 %v117
    %v166 = vunpack.c.h.b16 %v117
    %v167 = vunpack.c.l.b16 %v118
    %v168 = vunpack.c.h.b16 %v118
    %v169 = vunpack.c.l.b16 %v119
    %v170 = vunpack.c.h.b16 %v119
    %v171 = vunpack.c.l.b16 %v120
    %v172 = vunpack.c.h.b16 %v120
    %v173 = vunpack.c.l.b16 %v121
    %v174 = vunpack.c.h.b16 %v121
    %v175 = vunpack.c.l.b16 %v122
    %v176 = vunpack.c.h.b16 %v122
    %v177 = vpack.c.b16 %v147, %v145
    %v178 = vpack.c.b16 %v148, %v146
    %v179 = vpack.c.b16 %v151, %v149
    %v180 = vpack.c.b16 %v152, %v150
    %v181 = vpack.c.b16 %v155, %v153
    %v182 = vpack.c.b16 %v156, %v154
    %v183 = vpack.c.b16 %v159, %v157
    %v184 = vpack.c.b16 %v160, %v158
    %v185 = vpack.c.b16 %v163, %v161
    %v186 = vpack.c.b16 %v164, %v162
    %v187 = vpack.c.b16 %v167, %v165
    %v188 = vpack.c.b16 %v168, %v166
    %v189 = vpack.c.b16 %v171, %v169
    %v190 = vpack.c.b16 %v172, %v170
    %v191 = vpack.c.b16 %v175, %v173
    %v192 = vpack.c.b16 %v176, %v174
    %209 = vmatpush.bf16.msra.mxu0 %v191
    %210 = vmatpush.bf16.msra.mxu0 %v189
    %211 = vmatpush.bf16.msra.mxu0 %v187
    %212 = vmatpush.bf16.msra.mxu0 %v185
    %213 = vmatpush.bf16.msra.mxu0 %v183
    %214 = vmatpush.bf16.msra.mxu0 %v181
    %215 = vmatpush.bf16.msra.mxu0 %v179
    %216 = vmatpush.bf16.msra.mxu0 %v177
    %217 = vmatmul.bf16.gmra.mxu0 %v106
    %v218 = vpop.f32.mrf.mxu0
    %v219 = vadd.f32 %v125, %v218
    %v220 = vpop.f32.mrf.mxu0
    %v221 = vadd.f32 %v125, %v220
    %222 = vdwg.mxu0
    %223 = vmatpush.bf16.msra.mxu0 %v192
    %224 = vmatpush.bf16.msra.mxu0 %v190
    %225 = vmatpush.bf16.msra.mxu0 %v188
    %226 = vmatpush.bf16.msra.mxu0 %v186
    %227 = vmatpush.bf16.msra.mxu0 %v184
    %228 = vmatpush.bf16.msra.mxu0 %v182
    %229 = vmatpush.bf16.msra.mxu0 %v180
    %230 = vmatpush.bf16.msra.mxu0 %v178
    %231 = vmatmul.bf16.gmra.mxu0 %v106
    %v232 = vpop.f32.mrf.mxu0
    %v233 = vadd.f32 %v126, %v232
    %v234 = vpop.f32.mrf.mxu0
    %v235 = vadd.f32 %v126, %v234
    %236 = vdwg.mxu0
    %v237 = vmax.f32 %v219, 0.0
    %v238 = vmax.f32 %v233, 0.0
    %v239 = vmax.f32 %v221, 0.0
    %v240 = vmax.f32 %v235, 0.0
    %v241 = vpack.c.bf16 %v239, %v237
    %v242 = vpack.c.bf16 %v240, %v238
    %v243 = vld [vmem:[#allocation4] sm:$0xff]
    %v244 = vld [vmem:[#allocation4 + $0x8] sm:$0xff]
    %v245 = vld [vmem:[#allocation4 + $0x10] sm:$0xff]
    %v246 = vld [vmem:[#allocation4 + $0x18] sm:$0xff]
    %v247 = vld [vmem:[#allocation4 + $0x20] sm:$0xff]
    %v248 = vld [vmem:[#allocation4 + $0x28] sm:$0xff]
    %v249 = vld [vmem:[#allocation4 + $0x30] sm:$0xff]
    %v250 = vld [vmem:[#allocation4 + $0x38] sm:$0xff]
    %v251 = vld [vmem:[#allocation4 + $0x40] sm:$0xff]
    %v252 = vld [vmem:[#allocation4 + $0x48] sm:$0xff]
    %v253 = vld [vmem:[#allocation4 + $0x50] sm:$0xff]
    %v254 = vld [vmem:[#allocation4 + $0x58] sm:$0xff]
    %v255 = vld [vmem:[#allocation4 + $0x60] sm:$0xff]
    %v256 = vld [vmem:[#allocation4 + $0x68] sm:$0xff]
    %v257 = vld [vmem:[#allocation4 + $0x70] sm:$0xff]
    %v258 = vld [vmem:[#allocation4 + $0x78] sm:$0xff]
    %v259 = vld [vmem:[#allocation4 + $0x80] sm:$0xff]
    %v260 = vld [vmem:[#allocation4 + $0x88] sm:$0xff]
    %v261 = vld [vmem:[#allocation4 + $0x90] sm:$0xff]
    %v262 = vld [vmem:[#allocation4 + $0x98] sm:$0xff]
    %v263 = vld [vmem:[#allocation4 + $0xa0] sm:$0xff]
    %v264 = vld [vmem:[#allocation4 + $0xa8] sm:$0xff]
    %v265 = vld [vmem:[#allocation4 + $0xb0] sm:$0xff]
    %v266 = vld [vmem:[#allocation4 + $0xb8] sm:$0xff]
    %v267 = vld [vmem:[#allocation4 + $0xc0] sm:$0xff]
    %v268 = vld [vmem:[#allocation4 + $0xc8] sm:$0xff]
    %v269 = vld [vmem:[#allocation4 + $0xd0] sm:$0xff]
    %v270 = vld [vmem:[#allocation4 + $0xd8] sm:$0xff]
    %v271 = vld [vmem:[#allocation4 + $0xe0] sm:$0xff]
    %v272 = vld [vmem:[#allocation4 + $0xe8] sm:$0xff]
    %v273 = vld [vmem:[#allocation4 + $0xf0] sm:$0xff]
    %v274 = vld [vmem:[#allocation4 + $0xf8] sm:$0xff]
    %v275 = vld [vmem:[#allocation4 + $0x100] sm:$0xff]
    %v276 = vld [vmem:[#allocation4 + $0x108] sm:$0xff]
    %v277 = vld [vmem:[#allocation4 + $0x110] sm:$0xff]
    %v278 = vld [vmem:[#allocation4 + $0x118] sm:$0xff]
    %v279 = vld [vmem:[#allocation4 + $0x120] sm:$0xff]
    %v280 = vld [vmem:[#allocation4 + $0x128] sm:$0xff]
    %v281 = vld [vmem:[#allocation4 + $0x130] sm:$0xff]
    %v282 = vld [vmem:[#allocation4 + $0x138] sm:$0xff]
    %v283 = vld [vmem:[#allocation4 + $0x140] sm:$0xff]
    %v284 = vld [vmem:[#allocation4 + $0x148] sm:$0xff]
    %v285 = vld [vmem:[#allocation4 + $0x150] sm:$0xff]
    %v286 = vld [vmem:[#allocation4 + $0x158] sm:$0xff]
    %v287 = vld [vmem:[#allocation4 + $0x160] sm:$0xff]
    %v288 = vld [vmem:[#allocation4 + $0x168] sm:$0xff]
    %v289 = vld [vmem:[#allocation4 + $0x170] sm:$0xff]
    %v290 = vld [vmem:[#allocation4 + $0x178] sm:$0xff]
    %v291 = vld [vmem:[#allocation4 + $0x180] sm:$0xff]
    %v292 = vld [vmem:[#allocation4 + $0x188] sm:$0xff]
    %v293 = vld [vmem:[#allocation4 + $0x190] sm:$0xff]
    %v294 = vld [vmem:[#allocation4 + $0x198] sm:$0xff]
    %v295 = vld [vmem:[#allocation4 + $0x1a0] sm:$0xff]
    %v296 = vld [vmem:[#allocation4 + $0x1a8] sm:$0xff]
    %v297 = vld [vmem:[#allocation4 + $0x1b0] sm:$0xff]
    %v298 = vld [vmem:[#allocation4 + $0x1b8] sm:$0xff]
    %v299 = vld [vmem:[#allocation4 + $0x1c0] sm:$0xff]
    %v300 = vld [vmem:[#allocation4 + $0x1c8] sm:$0xff]
    %v301 = vld [vmem:[#allocation4 + $0x1d0] sm:$0xff]
    %v302 = vld [vmem:[#allocation4 + $0x1d8] sm:$0xff]
    %v303 = vld [vmem:[#allocation4 + $0x1e0] sm:$0xff]
    %v304 = vld [vmem:[#allocation4 + $0x1e8] sm:$0xff]
    %v305 = vld [vmem:[#allocation4 + $0x1f0] sm:$0xff]
    %v306 = vld [vmem:[#allocation4 + $0x1f8] sm:$0xff]
    %v307 = vld [vmem:[%s6 + $0x2] sm:$0xf]
    %v309 = vperm.slane %v307, 0
    %v310 = vperm.slane %v307, 1
    %v311 = vperm.slane %v307, 2
    %v312 = vperm.slane %v307, 3
    %v381 = vunpack.c.l.b16 %v243
    %v382 = vunpack.c.h.b16 %v243
    %v383 = vunpack.c.l.b16 %v244
    %v384 = vunpack.c.h.b16 %v244
    %v385 = vunpack.c.l.b16 %v245
    %v386 = vunpack.c.h.b16 %v245
    %v387 = vunpack.c.l.b16 %v246
    %v388 = vunpack.c.h.b16 %v246
    %v389 = vunpack.c.l.b16 %v247
    %v390 = vunpack.c.h.b16 %v247
    %v391 = vunpack.c.l.b16 %v248
    %v392 = vunpack.c.h.b16 %v248
    %v393 = vunpack.c.l.b16 %v249
    %v394 = vunpack.c.h.b16 %v249
    %v395 = vunpack.c.l.b16 %v250
    %v396 = vunpack.c.h.b16 %v250
    %v397 = vunpack.c.l.b16 %v251
    %v398 = vunpack.c.h.b16 %v251
    %v399 = vunpack.c.l.b16 %v252
    %v400 = vunpack.c.h.b16 %v252
    %v401 = vunpack.c.l.b16 %v253
    %v402 = vunpack.c.h.b16 %v253
    %v403 = vunpack.c.l.b16 %v254
    %v404 = vunpack.c.h.b16 %v254
    %v405 = vunpack.c.l.b16 %v255
    %v406 = vunpack.c.h.b16 %v255
    %v407 = vunpack.c.l.b16 %v256
    %v408 = vunpack.c.h.b16 %v256
    %v409 = vunpack.c.l.b16 %v257
    %v410 = vunpack.c.h.b16 %v257
    %v411 = vunpack.c.l.b16 %v258
    %v412 = vunpack.c.h.b16 %v258
    %v413 = vunpack.c.l.b16 %v259
    %v414 = vunpack.c.h.b16 %v259
    %v415 = vunpack.c.l.b16 %v260
    %v416 = vunpack.c.h.b16 %v260
    %v417 = vunpack.c.l.b16 %v261
    %v418 = vunpack.c.h.b16 %v261
    %v419 = vunpack.c.l.b16 %v262
    %v420 = vunpack.c.h.b16 %v262
    %v421 = vunpack.c.l.b16 %v263
    %v422 = vunpack.c.h.b16 %v263
    %v423 = vunpack.c.l.b16 %v264
    %v424 = vunpack.c.h.b16 %v264
    %v425 = vunpack.c.l.b16 %v265
    %v426 = vunpack.c.h.b16 %v265
    %v427 = vunpack.c.l.b16 %v266
    %v428 = vunpack.c.h.b16 %v266
    %v429 = vunpack.c.l.b16 %v267
    %v430 = vunpack.c.h.b16 %v267
    %v431 = vunpack.c.l.b16 %v268
    %v432 = vunpack.c.h.b16 %v268
    %v433 = vunpack.c.l.b16 %v269
    %v434 = vunpack.c.h.b16 %v269
    %v435 = vunpack.c.l.b16 %v270
    %v436 = vunpack.c.h.b16 %v270
    %v437 = vunpack.c.l.b16 %v271
    %v438 = vunpack.c.h.b16 %v271
    %v439 = vunpack.c.l.b16 %v272
    %v440 = vunpack.c.h.b16 %v272
    %v441 = vunpack.c.l.b16 %v273
    %v442 = vunpack.c.h.b16 %v273
    %v443 = vunpack.c.l.b16 %v274
    %v444 = vunpack.c.h.b16 %v274
    %v445 = vunpack.c.l.b16 %v275
    %v446 = vunpack.c.h.b16 %v275
    %v447 = vunpack.c.l.b16 %v276
    %v448 = vunpack.c.h.b16 %v276
    %v449 = vunpack.c.l.b16 %v277
    %v450 = vunpack.c.h.b16 %v277
    %v451 = vunpack.c.l.b16 %v278
    %v452 = vunpack.c.h.b16 %v278
    %v453 = vunpack.c.l.b16 %v279
    %v454 = vunpack.c.h.b16 %v279
    %v455 = vunpack.c.l.b16 %v280
    %v456 = vunpack.c.h.b16 %v280
    %v457 = vunpack.c.l.b16 %v281
    %v458 = vunpack.c.h.b16 %v281
    %v459 = vunpack.c.l.b16 %v282
    %v460 = vunpack.c.h.b16 %v282
    %v461 = vunpack.c.l.b16 %v283
    %v462 = vunpack.c.h.b16 %v283
    %v463 = vunpack.c.l.b16 %v284
    %v464 = vunpack.c.h.b16 %v284
    %v465 = vunpack.c.l.b16 %v285
    %v466 = vunpack.c.h.b16 %v285
    %v467 = vunpack.c.l.b16 %v286
    %v468 = vunpack.c.h.b16 %v286
    %v469 = vunpack.c.l.b16 %v287
    %v470 = vunpack.c.h.b16 %v287
    %v471 = vunpack.c.l.b16 %v288
    %v472 = vunpack.c.h.b16 %v288
    %v473 = vunpack.c.l.b16 %v289
    %v474 = vunpack.c.h.b16 %v289
    %v475 = vunpack.c.l.b16 %v290
    %v476 = vunpack.c.h.b16 %v290
    %v477 = vunpack.c.l.b16 %v291
    %v478 = vunpack.c.h.b16 %v291
    %v479 = vunpack.c.l.b16 %v292
    %v480 = vunpack.c.h.b16 %v292
    %v481 = vunpack.c.l.b16 %v293
    %v482 = vunpack.c.h.b16 %v293
    %v483 = vunpack.c.l.b16 %v294
    %v484 = vunpack.c.h.b16 %v294
    %v485 = vunpack.c.l.b16 %v295
    %v486 = vunpack.c.h.b16 %v295
    %v487 = vunpack.c.l.b16 %v296
    %v488 = vunpack.c.h.b16 %v296
    %v489 = vunpack.c.l.b16 %v297
    %v490 = vunpack.c.h.b16 %v297
    %v491 = vunpack.c.l.b16 %v298
    %v492 = vunpack.c.h.b16 %v298
    %v493 = vunpack.c.l.b16 %v299
    %v494 = vunpack.c.h.b16 %v299
    %v495 = vunpack.c.l.b16 %v300
    %v496 = vunpack.c.h.b16 %v300
    %v497 = vunpack.c.l.b16 %v301
    %v498 = vunpack.c.h.b16 %v301
    %v499 = vunpack.c.l.b16 %v302
    %v500 = vunpack.c.h.b16 %v302
    %v501 = vunpack.c.l.b16 %v303
    %v502 = vunpack.c.h.b16 %v303
    %v503 = vunpack.c.l.b16 %v304
    %v504 = vunpack.c.h.b16 %v304
    %v505 = vunpack.c.l.b16 %v305
    %v506 = vunpack.c.h.b16 %v305
    %v507 = vunpack.c.l.b16 %v306
    %v508 = vunpack.c.h.b16 %v306
    %v509 = vpack.c.b16 %v385, %v381
    %v510 = vpack.c.b16 %v386, %v382
    %v511 = vpack.c.b16 %v387, %v383
    %v512 = vpack.c.b16 %v388, %v384
    %v513 = vpack.c.b16 %v393, %v389
    %v514 = vpack.c.b16 %v394, %v390
    %v515 = vpack.c.b16 %v395, %v391
    %v516 = vpack.c.b16 %v396, %v392
    %v517 = vpack.c.b16 %v401, %v397
    %v518 = vpack.c.b16 %v402, %v398
    %v519 = vpack.c.b16 %v403, %v399
    %v520 = vpack.c.b16 %v404, %v400
    %v521 = vpack.c.b16 %v409, %v405
    %v522 = vpack.c.b16 %v410, %v406
    %v523 = vpack.c.b16 %v411, %v407
    %v524 = vpack.c.b16 %v412, %v408
    %v525 = vpack.c.b16 %v417, %v413
    %v526 = vpack.c.b16 %v418, %v414
    %v527 = vpack.c.b16 %v419, %v415
    %v528 = vpack.c.b16 %v420, %v416
    %v529 = vpack.c.b16 %v425, %v421
    %v530 = vpack.c.b16 %v426, %v422
    %v531 = vpack.c.b16 %v427, %v423
    %v532 = vpack.c.b16 %v428, %v424
    %v533 = vpack.c.b16 %v433, %v429
    %v534 = vpack.c.b16 %v434, %v430
    %v535 = vpack.c.b16 %v435, %v431
    %v536 = vpack.c.b16 %v436, %v432
    %v537 = vpack.c.b16 %v441, %v437
    %v538 = vpack.c.b16 %v442, %v438
    %v539 = vpack.c.b16 %v443, %v439
    %v540 = vpack.c.b16 %v444, %v440
    %v541 = vpack.c.b16 %v449, %v445
    %v542 = vpack.c.b16 %v450, %v446
    %v543 = vpack.c.b16 %v451, %v447
    %v544 = vpack.c.b16 %v452, %v448
    %v545 = vpack.c.b16 %v457, %v453
    %v546 = vpack.c.b16 %v458, %v454
    %v547 = vpack.c.b16 %v459, %v455
    %v548 = vpack.c.b16 %v460, %v456
    %v549 = vpack.c.b16 %v465, %v461
    %v550 = vpack.c.b16 %v466, %v462
    %v551 = vpack.c.b16 %v467, %v463
    %v552 = vpack.c.b16 %v468, %v464
    %v553 = vpack.c.b16 %v473, %v469
    %v554 = vpack.c.b16 %v474, %v470
    %v555 = vpack.c.b16 %v475, %v471
    %v556 = vpack.c.b16 %v476, %v472
    %v557 = vpack.c.b16 %v481, %v477
    %v558 = vpack.c.b16 %v482, %v478
    %v559 = vpack.c.b16 %v483, %v479
    %v560 = vpack.c.b16 %v484, %v480
    %v561 = vpack.c.b16 %v489, %v485
    %v562 = vpack.c.b16 %v490, %v486
    %v563 = vpack.c.b16 %v491, %v487
    %v564 = vpack.c.b16 %v492, %v488
    %v565 = vpack.c.b16 %v497, %v493
    %v566 = vpack.c.b16 %v498, %v494
    %v567 = vpack.c.b16 %v499, %v495
    %v568 = vpack.c.b16 %v500, %v496
    %v569 = vpack.c.b16 %v505, %v501
    %v570 = vpack.c.b16 %v506, %v502
    %v571 = vpack.c.b16 %v507, %v503
    %v572 = vpack.c.b16 %v508, %v504
    %637 = vmatpush.bf16.msra.mxu0 %v537
    %638 = vmatpush.bf16.msra.mxu0 %v533
    %639 = vmatpush.bf16.msra.mxu0 %v529
    %640 = vmatpush.bf16.msra.mxu0 %v525
    %641 = vmatpush.bf16.msra.mxu0 %v521
    %642 = vmatpush.bf16.msra.mxu0 %v517
    %643 = vmatpush.bf16.msra.mxu0 %v513
    %644 = vmatpush.bf16.msra.mxu0 %v509
    %645 = vmatmul.bf16.gmra.mxu0 %v241
    %v646 = vpop.f32.mrf.mxu0
    %v647 = vadd.f32 %v309, %v646
    %v648 = vpop.f32.mrf.mxu0
    %v649 = vadd.f32 %v309, %v648
    %650 = vdwg.mxu0
    %651 = vmatpush.bf16.msra.mxu0 %v569
    %652 = vmatpush.bf16.msra.mxu0 %v565
    %653 = vmatpush.bf16.msra.mxu0 %v561
    %654 = vmatpush.bf16.msra.mxu0 %v557
    %655 = vmatpush.bf16.msra.mxu0 %v553
    %656 = vmatpush.bf16.msra.mxu0 %v549
    %657 = vmatpush.bf16.msra.mxu0 %v545
    %658 = vmatpush.bf16.msra.mxu0 %v541
    %659 = vmatmul.bf16.gmra.mxu0 %v242
    %v660 = vpop.f32.mrf.mxu0
    %v661 = vadd.f32 %v647, %v660
    %v662 = vpop.f32.mrf.mxu0
    %v663 = vadd.f32 %v649, %v662
    %664 = vdwg.mxu0
    %665 = vmatpush.bf16.msra.mxu0 %v538
    %666 = vmatpush.bf16.msra.mxu0 %v534
    %667 = vmatpush.bf16.msra.mxu0 %v530
    %668 = vmatpush.bf16.msra.mxu0 %v526
    %669 = vmatpush.bf16.msra.mxu0 %v522
    %670 = vmatpush.bf16.msra.mxu0 %v518
    %671 = vmatpush.bf16.msra.mxu0 %v514
    %672 = vmatpush.bf16.msra.mxu0 %v510
    %673 = vmatmul.bf16.gmra.mxu0 %v241
    %v674 = vpop.f32.mrf.mxu0
    %v675 = vadd.f32 %v310, %v674
    %v676 = vpop.f32.mrf.mxu0
    %v677 = vadd.f32 %v310, %v676
    %678 = vdwg.mxu0
    %679 = vmatpush.bf16.msra.mxu0 %v570
    %680 = vmatpush.bf16.msra.mxu0 %v566
    %681 = vmatpush.bf16.msra.mxu0 %v562
    %682 = vmatpush.bf16.msra.mxu0 %v558
    %683 = vmatpush.bf16.msra.mxu0 %v554
    %684 = vmatpush.bf16.msra.mxu0 %v550
    %685 = vmatpush.bf16.msra.mxu0 %v546
    %686 = vmatpush.bf16.msra.mxu0 %v542
    %687 = vmatmul.bf16.gmra.mxu0 %v242
    %v688 = vpop.f32.mrf.mxu0
    %v689 = vadd.f32 %v675, %v688
    %v690 = vpop.f32.mrf.mxu0
    %v691 = vadd.f32 %v677, %v690
    %692 = vdwg.mxu0
    %693 = vmatpush.bf16.msra.mxu0 %v539
    %694 = vmatpush.bf16.msra.mxu0 %v535
    %695 = vmatpush.bf16.msra.mxu0 %v531
    %696 = vmatpush.bf16.msra.mxu0 %v527
    %697 = vmatpush.bf16.msra.mxu0 %v523
    %698 = vmatpush.bf16.msra.mxu0 %v519
    %699 = vmatpush.bf16.msra.mxu0 %v515
    %700 = vmatpush.bf16.msra.mxu0 %v511
    %701 = vmatmul.bf16.gmra.mxu0 %v241
    %v702 = vpop.f32.mrf.mxu0
    %v703 = vadd.f32 %v311, %v702
    %v704 = vpop.f32.mrf.mxu0
    %v705 = vadd.f32 %v311, %v704
    %706 = vdwg.mxu0
    %707 = vmatpush.bf16.msra.mxu0 %v571
    %708 = vmatpush.bf16.msra.mxu0 %v567
    %709 = vmatpush.bf16.msra.mxu0 %v563
    %710 = vmatpush.bf16.msra.mxu0 %v559
    %711 = vmatpush.bf16.msra.mxu0 %v555
    %712 = vmatpush.bf16.msra.mxu0 %v551
    %713 = vmatpush.bf16.msra.mxu0 %v547
    %714 = vmatpush.bf16.msra.mxu0 %v543
    %715 = vmatmul.bf16.gmra.mxu0 %v242
    %v716 = vpop.f32.mrf.mxu0
    %v717 = vadd.f32 %v703, %v716
    %v718 = vpop.f32.mrf.mxu0
    %v719 = vadd.f32 %v705, %v718
    %720 = vdwg.mxu0
    %721 = vmatpush.bf16.msra.mxu0 %v540
    %722 = vmatpush.bf16.msra.mxu0 %v536
    %723 = vmatpush.bf16.msra.mxu0 %v532
    %724 = vmatpush.bf16.msra.mxu0 %v528
    %725 = vmatpush.bf16.msra.mxu0 %v524
    %726 = vmatpush.bf16.msra.mxu0 %v520
    %727 = vmatpush.bf16.msra.mxu0 %v516
    %728 = vmatpush.bf16.msra.mxu0 %v512
    %729 = vmatmul.bf16.gmra.mxu0 %v241
    %v730 = vpop.f32.mrf.mxu0
    %v731 = vadd.f32 %v312, %v730
    %v732 = vpop.f32.mrf.mxu0
    %v733 = vadd.f32 %v312, %v732
    %734 = vdwg.mxu0
    %735 = vmatpush.bf16.msra.mxu0 %v572
    %736 = vmatpush.bf16.msra.mxu0 %v568
    %737 = vmatpush.bf16.msra.mxu0 %v564
    %738 = vmatpush.bf16.msra.mxu0 %v560
    %739 = vmatpush.bf16.msra.mxu0 %v556
    %740 = vmatpush.bf16.msra.mxu0 %v552
    %741 = vmatpush.bf16.msra.mxu0 %v548
    %742 = vmatpush.bf16.msra.mxu0 %v544
    %743 = vmatmul.bf16.gmra.mxu0 %v242
    %v744 = vpop.f32.mrf.mxu0
    %v745 = vadd.f32 %v731, %v744
    %v746 = vpop.f32.mrf.mxu0
    %v747 = vadd.f32 %v733, %v746
    %748 = vdwg.mxu0
    %v749 = vmax.f32 %v661, 0.0
    %v750 = vmax.f32 %v689, 0.0
    %v751 = vmax.f32 %v717, 0.0
    %v752 = vmax.f32 %v745, 0.0
    %v753 = vmax.f32 %v663, 0.0
    %v754 = vmax.f32 %v691, 0.0
    %v755 = vmax.f32 %v719, 0.0
    %v756 = vmax.f32 %v747, 0.0
    %v757 = vpack.c.bf16 %v753, %v749
    %v758 = vpack.c.bf16 %v754, %v750
    %v759 = vpack.c.bf16 %v755, %v751
    %v760 = vpack.c.bf16 %v756, %v752
    %v761 = vld [vmem:[#allocation6] sm:$0xff]
    %v762 = vld [vmem:[#allocation6 + $0x8] sm:$0xff]
    %v763 = vld [vmem:[#allocation6 + $0x10] sm:$0xff]
    %v764 = vld [vmem:[#allocation6 + $0x18] sm:$0xff]
    %v765 = vld [vmem:[#allocation6 + $0x20] sm:$0xff]
    %v766 = vld [vmem:[#allocation6 + $0x28] sm:$0xff]
    %v767 = vld [vmem:[#allocation6 + $0x30] sm:$0xff]
    %v768 = vld [vmem:[#allocation6 + $0x38] sm:$0xff]
    %v769 = vld [vmem:[#allocation6 + $0x40] sm:$0xff]
    %v770 = vld [vmem:[#allocation6 + $0x48] sm:$0xff]
    %v771 = vld [vmem:[#allocation6 + $0x50] sm:$0xff]
    %v772 = vld [vmem:[#allocation6 + $0x58] sm:$0xff]
    %v773 = vld [vmem:[#allocation6 + $0x60] sm:$0xff]
    %v774 = vld [vmem:[#allocation6 + $0x68] sm:$0xff]
    %v775 = vld [vmem:[#allocation6 + $0x70] sm:$0xff]
    %v776 = vld [vmem:[#allocation6 + $0x78] sm:$0xff]
    %v777 = vld [vmem:[#allocation6 + $0x80] sm:$0xff]
    %v778 = vld [vmem:[#allocation6 + $0x88] sm:$0xff]
    %v779 = vld [vmem:[#allocation6 + $0x90] sm:$0xff]
    %v780 = vld [vmem:[#allocation6 + $0x98] sm:$0xff]
    %v781 = vld [vmem:[#allocation6 + $0xa0] sm:$0xff]
    %v782 = vld [vmem:[#allocation6 + $0xa8] sm:$0xff]
    %v783 = vld [vmem:[#allocation6 + $0xb0] sm:$0xff]
    %v784 = vld [vmem:[#allocation6 + $0xb8] sm:$0xff]
    %v785 = vld [vmem:[#allocation6 + $0xc0] sm:$0xff]
    %v786 = vld [vmem:[#allocation6 + $0xc8] sm:$0xff]
    %v787 = vld [vmem:[#allocation6 + $0xd0] sm:$0xff]
    %v788 = vld [vmem:[#allocation6 + $0xd8] sm:$0xff]
    %v789 = vld [vmem:[#allocation6 + $0xe0] sm:$0xff]
    %v790 = vld [vmem:[#allocation6 + $0xe8] sm:$0xff]
    %v791 = vld [vmem:[#allocation6 + $0xf0] sm:$0xff]
    %v792 = vld [vmem:[#allocation6 + $0xf8] sm:$0xff]
    %v793 = vld [vmem:[#allocation6 + $0x100] sm:$0xff]
    %v794 = vld [vmem:[#allocation6 + $0x108] sm:$0xff]
    %v795 = vld [vmem:[#allocation6 + $0x110] sm:$0xff]
    %v796 = vld [vmem:[#allocation6 + $0x118] sm:$0xff]
    %v797 = vld [vmem:[#allocation6 + $0x120] sm:$0xff]
    %v798 = vld [vmem:[#allocation6 + $0x128] sm:$0xff]
    %v799 = vld [vmem:[#allocation6 + $0x130] sm:$0xff]
    %v800 = vld [vmem:[#allocation6 + $0x138] sm:$0xff]
    %v801 = vld [vmem:[#allocation6 + $0x140] sm:$0xff]
    %v802 = vld [vmem:[#allocation6 + $0x148] sm:$0xff]
    %v803 = vld [vmem:[#allocation6 + $0x150] sm:$0xff]
    %v804 = vld [vmem:[#allocation6 + $0x158] sm:$0xff]
    %v805 = vld [vmem:[#allocation6 + $0x160] sm:$0xff]
    %v806 = vld [vmem:[#allocation6 + $0x168] sm:$0xff]
    %v807 = vld [vmem:[#allocation6 + $0x170] sm:$0xff]
    %v808 = vld [vmem:[#allocation6 + $0x178] sm:$0xff]
    %v809 = vld [vmem:[#allocation6 + $0x180] sm:$0xff]
    %v810 = vld [vmem:[#allocation6 + $0x188] sm:$0xff]
    %v811 = vld [vmem:[#allocation6 + $0x190] sm:$0xff]
    %v812 = vld [vmem:[#allocation6 + $0x198] sm:$0xff]
    %v813 = vld [vmem:[#allocation6 + $0x1a0] sm:$0xff]
    %v814 = vld [vmem:[#allocation6 + $0x1a8] sm:$0xff]
    %v815 = vld [vmem:[#allocation6 + $0x1b0] sm:$0xff]
    %v816 = vld [vmem:[#allocation6 + $0x1b8] sm:$0xff]
    %v817 = vld [vmem:[#allocation6 + $0x1c0] sm:$0xff]
    %v818 = vld [vmem:[#allocation6 + $0x1c8] sm:$0xff]
    %v819 = vld [vmem:[#allocation6 + $0x1d0] sm:$0xff]
    %v820 = vld [vmem:[#allocation6 + $0x1d8] sm:$0xff]
    %v821 = vld [vmem:[#allocation6 + $0x1e0] sm:$0xff]
    %v822 = vld [vmem:[#allocation6 + $0x1e8] sm:$0xff]
    %v823 = vld [vmem:[#allocation6 + $0x1f0] sm:$0xff]
    %v824 = vld [vmem:[#allocation6 + $0x1f8] sm:$0xff]
    %v825 = vld [vmem:[#allocation6 + $0x200] sm:$0xff]
    %v826 = vld [vmem:[#allocation6 + $0x208] sm:$0xff]
    %v827 = vld [vmem:[#allocation6 + $0x210] sm:$0xff]
    %v828 = vld [vmem:[#allocation6 + $0x218] sm:$0xff]
    %v829 = vld [vmem:[#allocation6 + $0x220] sm:$0xff]
    %v830 = vld [vmem:[#allocation6 + $0x228] sm:$0xff]
    %v831 = vld [vmem:[#allocation6 + $0x230] sm:$0xff]
    %v832 = vld [vmem:[#allocation6 + $0x238] sm:$0xff]
    %v833 = vld [vmem:[#allocation6 + $0x240] sm:$0xff]
    %v834 = vld [vmem:[#allocation6 + $0x248] sm:$0xff]
    %v835 = vld [vmem:[#allocation6 + $0x250] sm:$0xff]
    %v836 = vld [vmem:[#allocation6 + $0x258] sm:$0xff]
    %v837 = vld [vmem:[#allocation6 + $0x260] sm:$0xff]
    %v838 = vld [vmem:[#allocation6 + $0x268] sm:$0xff]
    %v839 = vld [vmem:[#allocation6 + $0x270] sm:$0xff]
    %v840 = vld [vmem:[#allocation6 + $0x278] sm:$0xff]
    %v841 = vld [vmem:[#allocation6 + $0x280] sm:$0xff]
    %v842 = vld [vmem:[#allocation6 + $0x288] sm:$0xff]
    %v843 = vld [vmem:[#allocation6 + $0x290] sm:$0xff]
    %v844 = vld [vmem:[#allocation6 + $0x298] sm:$0xff]
    %v845 = vld [vmem:[#allocation6 + $0x2a0] sm:$0xff]
    %v846 = vld [vmem:[#allocation6 + $0x2a8] sm:$0xff]
    %v847 = vld [vmem:[#allocation6 + $0x2b0] sm:$0xff]
    %v848 = vld [vmem:[#allocation6 + $0x2b8] sm:$0xff]
    %v849 = vld [vmem:[#allocation6 + $0x2c0] sm:$0xff]
    %v850 = vld [vmem:[#allocation6 + $0x2c8] sm:$0xff]
    %v851 = vld [vmem:[#allocation6 + $0x2d0] sm:$0xff]
    %v852 = vld [vmem:[#allocation6 + $0x2d8] sm:$0xff]
    %v853 = vld [vmem:[#allocation6 + $0x2e0] sm:$0xff]
    %v854 = vld [vmem:[#allocation6 + $0x2e8] sm:$0xff]
    %v855 = vld [vmem:[#allocation6 + $0x2f0] sm:$0xff]
    %v856 = vld [vmem:[#allocation6 + $0x2f8] sm:$0xff]
    %v857 = vld [vmem:[#allocation6 + $0x300] sm:$0xff]
    %v858 = vld [vmem:[#allocation6 + $0x308] sm:$0xff]
    %v859 = vld [vmem:[#allocation6 + $0x310] sm:$0xff]
    %v860 = vld [vmem:[#allocation6 + $0x318] sm:$0xff]
    %v861 = vld [vmem:[#allocation6 + $0x320] sm:$0xff]
    %v862 = vld [vmem:[#allocation6 + $0x328] sm:$0xff]
    %v863 = vld [vmem:[#allocation6 + $0x330] sm:$0xff]
    %v864 = vld [vmem:[#allocation6 + $0x338] sm:$0xff]
    %v865 = vld [vmem:[#allocation6 + $0x340] sm:$0xff]
    %v866 = vld [vmem:[#allocation6 + $0x348] sm:$0xff]
    %v867 = vld [vmem:[#allocation6 + $0x350] sm:$0xff]
    %v868 = vld [vmem:[#allocation6 + $0x358] sm:$0xff]
    %v869 = vld [vmem:[#allocation6 + $0x360] sm:$0xff]
    %v870 = vld [vmem:[#allocation6 + $0x368] sm:$0xff]
    %v871 = vld [vmem:[#allocation6 + $0x370] sm:$0xff]
    %v872 = vld [vmem:[#allocation6 + $0x378] sm:$0xff]
    %v873 = vld [vmem:[#allocation6 + $0x380] sm:$0xff]
    %v874 = vld [vmem:[#allocation6 + $0x388] sm:$0xff]
    %v875 = vld [vmem:[#allocation6 + $0x390] sm:$0xff]
    %v876 = vld [vmem:[#allocation6 + $0x398] sm:$0xff]
    %v877 = vld [vmem:[#allocation6 + $0x3a0] sm:$0xff]
    %v878 = vld [vmem:[#allocation6 + $0x3a8] sm:$0xff]
    %v879 = vld [vmem:[#allocation6 + $0x3b0] sm:$0xff]
    %v880 = vld [vmem:[#allocation6 + $0x3b8] sm:$0xff]
    %v881 = vld [vmem:[#allocation6 + $0x3c0] sm:$0xff]
    %v882 = vld [vmem:[#allocation6 + $0x3c8] sm:$0xff]
    %v883 = vld [vmem:[#allocation6 + $0x3d0] sm:$0xff]
    %v884 = vld [vmem:[#allocation6 + $0x3d8] sm:$0xff]
    %v885 = vld [vmem:[#allocation6 + $0x3e0] sm:$0xff]
    %v886 = vld [vmem:[#allocation6 + $0x3e8] sm:$0xff]
    %v887 = vld [vmem:[#allocation6 + $0x3f0] sm:$0xff]
    %v888 = vld [vmem:[#allocation6 + $0x3f8] sm:$0xff]
    %v889 = vld [vmem:[%s6 + $0x6] sm:$0xf]
    %v891 = vperm.slane %v889, 0
    %v892 = vperm.slane %v889, 1
    %v893 = vperm.slane %v889, 2
    %v894 = vperm.slane %v889, 3
    %v1027 = vunpack.c.l.b16 %v761
    %v1028 = vunpack.c.h.b16 %v761
    %v1029 = vunpack.c.l.b16 %v762
    %v1030 = vunpack.c.h.b16 %v762
    %v1031 = vunpack.c.l.b16 %v763
    %v1032 = vunpack.c.h.b16 %v763
    %v1033 = vunpack.c.l.b16 %v764
    %v1034 = vunpack.c.h.b16 %v764
    %v1035 = vunpack.c.l.b16 %v765
    %v1036 = vunpack.c.h.b16 %v765
    %v1037 = vunpack.c.l.b16 %v766
    %v1038 = vunpack.c.h.b16 %v766
    %v1039 = vunpack.c.l.b16 %v767
    %v1040 = vunpack.c.h.b16 %v767
    %v1041 = vunpack.c.l.b16 %v768
    %v1042 = vunpack.c.h.b16 %v768
    %v1043 = vunpack.c.l.b16 %v769
    %v1044 = vunpack.c.h.b16 %v769
    %v1045 = vunpack.c.l.b16 %v770
    %v1046 = vunpack.c.h.b16 %v770
    %v1047 = vunpack.c.l.b16 %v771
    %v1048 = vunpack.c.h.b16 %v771
    %v1049 = vunpack.c.l.b16 %v772
    %v1050 = vunpack.c.h.b16 %v772
    %v1051 = vunpack.c.l.b16 %v773
    %v1052 = vunpack.c.h.b16 %v773
    %v1053 = vunpack.c.l.b16 %v774
    %v1054 = vunpack.c.h.b16 %v774
    %v1055 = vunpack.c.l.b16 %v775
    %v1056 = vunpack.c.h.b16 %v775
    %v1057 = vunpack.c.l.b16 %v776
    %v1058 = vunpack.c.h.b16 %v776
    %v1059 = vunpack.c.l.b16 %v777
    %v1060 = vunpack.c.h.b16 %v777
    %v1061 = vunpack.c.l.b16 %v778
    %v1062 = vunpack.c.h.b16 %v778
    %v1063 = vunpack.c.l.b16 %v779
    %v1064 = vunpack.c.h.b16 %v779
    %v1065 = vunpack.c.l.b16 %v780
    %v1066 = vunpack.c.h.b16 %v780
    %v1067 = vunpack.c.l.b16 %v781
    %v1068 = vunpack.c.h.b16 %v781
    %v1069 = vunpack.c.l.b16 %v782
    %v1070 = vunpack.c.h.b16 %v782
    %v1071 = vunpack.c.l.b16 %v783
    %v1072 = vunpack.c.h.b16 %v783
    %v1073 = vunpack.c.l.b16 %v784
    %v1074 = vunpack.c.h.b16 %v784
    %v1075 = vunpack.c.l.b16 %v785
    %v1076 = vunpack.c.h.b16 %v785
    %v1077 = vunpack.c.l.b16 %v786
    %v1078 = vunpack.c.h.b16 %v786
    %v1079 = vunpack.c.l.b16 %v787
    %v1080 = vunpack.c.h.b16 %v787
    %v1081 = vunpack.c.l.b16 %v788
    %v1082 = vunpack.c.h.b16 %v788
    %v1083 = vunpack.c.l.b16 %v789
    %v1084 = vunpack.c.h.b16 %v789
    %v1085 = vunpack.c.l.b16 %v790
    %v1086 = vunpack.c.h.b16 %v790
    %v1087 = vunpack.c.l.b16 %v791
    %v1088 = vunpack.c.h.b16 %v791
    %v1089 = vunpack.c.l.b16 %v792
    %v1090 = vunpack.c.h.b16 %v792
    %v1091 = vunpack.c.l.b16 %v793
    %v1092 = vunpack.c.h.b16 %v793
    %v1093 = vunpack.c.l.b16 %v794
    %v1094 = vunpack.c.h.b16 %v794
    %v1095 = vunpack.c.l.b16 %v795
    %v1096 = vunpack.c.h.b16 %v795
    %v1097 = vunpack.c.l.b16 %v796
    %v1098 = vunpack.c.h.b16 %v796
    %v1099 = vunpack.c.l.b16 %v797
    %v1100 = vunpack.c.h.b16 %v797
    %v1101 = vunpack.c.l.b16 %v798
    %v1102 = vunpack.c.h.b16 %v798
    %v1103 = vunpack.c.l.b16 %v799
    %v1104 = vunpack.c.h.b16 %v799
    %v1105 = vunpack.c.l.b16 %v800
    %v1106 = vunpack.c.h.b16 %v800
    %v1107 = vunpack.c.l.b16 %v801
    %v1108 = vunpack.c.h.b16 %v801
    %v1109 = vunpack.c.l.b16 %v802
    %v1110 = vunpack.c.h.b16 %v802
    %v1111 = vunpack.c.l.b16 %v803
    %v1112 = vunpack.c.h.b16 %v803
    %v1113 = vunpack.c.l.b16 %v804
    %v1114 = vunpack.c.h.b16 %v804
    %v1115 = vunpack.c.l.b16 %v805
    %v1116 = vunpack.c.h.b16 %v805
    %v1117 = vunpack.c.l.b16 %v806
    %v1118 = vunpack.c.h.b16 %v806
    %v1119 = vunpack.c.l.b16 %v807
    %v1120 = vunpack.c.h.b16 %v807
    %v1121 = vunpack.c.l.b16 %v808
    %v1122 = vunpack.c.h.b16 %v808
    %v1123 = vunpack.c.l.b16 %v809
    %v1124 = vunpack.c.h.b16 %v809
    %v1125 = vunpack.c.l.b16 %v810
    %v1126 = vunpack.c.h.b16 %v810
    %v1127 = vunpack.c.l.b16 %v811
    %v1128 = vunpack.c.h.b16 %v811
    %v1129 = vunpack.c.l.b16 %v812
    %v1130 = vunpack.c.h.b16 %v812
    %v1131 = vunpack.c.l.b16 %v813
    %v1132 = vunpack.c.h.b16 %v813
    %v1133 = vunpack.c.l.b16 %v814
    %v1134 = vunpack.c.h.b16 %v814
    %v1135 = vunpack.c.l.b16 %v815
    %v1136 = vunpack.c.h.b16 %v815
    %v1137 = vunpack.c.l.b16 %v816
    %v1138 = vunpack.c.h.b16 %v816
    %v1139 = vunpack.c.l.b16 %v817
    %v1140 = vunpack.c.h.b16 %v817
    %v1141 = vunpack.c.l.b16 %v818
    %v1142 = vunpack.c.h.b16 %v818
    %v1143 = vunpack.c.l.b16 %v819
    %v1144 = vunpack.c.h.b16 %v819
    %v1145 = vunpack.c.l.b16 %v820
    %v1146 = vunpack.c.h.b16 %v820
    %v1147 = vunpack.c.l.b16 %v821
    %v1148 = vunpack.c.h.b16 %v821
    %v1149 = vunpack.c.l.b16 %v822
    %v1150 = vunpack.c.h.b16 %v822
    %v1151 = vunpack.c.l.b16 %v823
    %v1152 = vunpack.c.h.b16 %v823
    %v1153 = vunpack.c.l.b16 %v824
    %v1154 = vunpack.c.h.b16 %v824
    %v1155 = vunpack.c.l.b16 %v825
    %v1156 = vunpack.c.h.b16 %v825
    %v1157 = vunpack.c.l.b16 %v826
    %v1158 = vunpack.c.h.b16 %v826
    %v1159 = vunpack.c.l.b16 %v827
    %v1160 = vunpack.c.h.b16 %v827
    %v1161 = vunpack.c.l.b16 %v828
    %v1162 = vunpack.c.h.b16 %v828
    %v1163 = vunpack.c.l.b16 %v829
    %v1164 = vunpack.c.h.b16 %v829
    %v1165 = vunpack.c.l.b16 %v830
    %v1166 = vunpack.c.h.b16 %v830
    %v1167 = vunpack.c.l.b16 %v831
    %v1168 = vunpack.c.h.b16 %v831
    %v1169 = vunpack.c.l.b16 %v832
    %v1170 = vunpack.c.h.b16 %v832
    %v1171 = vunpack.c.l.b16 %v833
    %v1172 = vunpack.c.h.b16 %v833
    %v1173 = vunpack.c.l.b16 %v834
    %v1174 = vunpack.c.h.b16 %v834
    %v1175 = vunpack.c.l.b16 %v835
    %v1176 = vunpack.c.h.b16 %v835
    %v1177 = vunpack.c.l.b16 %v836
    %v1178 = vunpack.c.h.b16 %v836
    %v1179 = vunpack.c.l.b16 %v837
    %v1180 = vunpack.c.h.b16 %v837
    %v1181 = vunpack.c.l.b16 %v838
    %v1182 = vunpack.c.h.b16 %v838
    %v1183 = vunpack.c.l.b16 %v839
    %v1184 = vunpack.c.h.b16 %v839
    %v1185 = vunpack.c.l.b16 %v840
    %v1186 = vunpack.c.h.b16 %v840
    %v1187 = vunpack.c.l.b16 %v841
    %v1188 = vunpack.c.h.b16 %v841
    %v1189 = vunpack.c.l.b16 %v842
    %v1190 = vunpack.c.h.b16 %v842
    %v1191 = vunpack.c.l.b16 %v843
    %v1192 = vunpack.c.h.b16 %v843
    %v1193 = vunpack.c.l.b16 %v844
    %v1194 = vunpack.c.h.b16 %v844
    %v1195 = vunpack.c.l.b16 %v845
    %v1196 = vunpack.c.h.b16 %v845
    %v1197 = vunpack.c.l.b16 %v846
    %v1198 = vunpack.c.h.b16 %v846
    %v1199 = vunpack.c.l.b16 %v847
    %v1200 = vunpack.c.h.b16 %v847
    %v1201 = vunpack.c.l.b16 %v848
    %v1202 = vunpack.c.h.b16 %v848
    %v1203 = vunpack.c.l.b16 %v849
    %v1204 = vunpack.c.h.b16 %v849
    %v1205 = vunpack.c.l.b16 %v850
    %v1206 = vunpack.c.h.b16 %v850
    %v1207 = vunpack.c.l.b16 %v851
    %v1208 = vunpack.c.h.b16 %v851
    %v1209 = vunpack.c.l.b16 %v852
    %v1210 = vunpack.c.h.b16 %v852
    %v1211 = vunpack.c.l.b16 %v853
    %v1212 = vunpack.c.h.b16 %v853
    %v1213 = vunpack.c.l.b16 %v854
    %v1214 = vunpack.c.h.b16 %v854
    %v1215 = vunpack.c.l.b16 %v855
    %v1216 = vunpack.c.h.b16 %v855
    %v1217 = vunpack.c.l.b16 %v856
    %v1218 = vunpack.c.h.b16 %v856
    %v1219 = vunpack.c.l.b16 %v857
    %v1220 = vunpack.c.h.b16 %v857
    %v1221 = vunpack.c.l.b16 %v858
    %v1222 = vunpack.c.h.b16 %v858
    %v1223 = vunpack.c.l.b16 %v859
    %v1224 = vunpack.c.h.b16 %v859
    %v1225 = vunpack.c.l.b16 %v860
    %v1226 = vunpack.c.h.b16 %v860
    %v1227 = vunpack.c.l.b16 %v861
    %v1228 = vunpack.c.h.b16 %v861
    %v1229 = vunpack.c.l.b16 %v862
    %v1230 = vunpack.c.h.b16 %v862
    %v1231 = vunpack.c.l.b16 %v863
    %v1232 = vunpack.c.h.b16 %v863
    %v1233 = vunpack.c.l.b16 %v864
    %v1234 = vunpack.c.h.b16 %v864
    %v1235 = vunpack.c.l.b16 %v865
    %v1236 = vunpack.c.h.b16 %v865
    %v1237 = vunpack.c.l.b16 %v866
    %v1238 = vunpack.c.h.b16 %v866
    %v1239 = vunpack.c.l.b16 %v867
    %v1240 = vunpack.c.h.b16 %v867
    %v1241 = vunpack.c.l.b16 %v868
    %v1242 = vunpack.c.h.b16 %v868
    %v1243 = vunpack.c.l.b16 %v869
    %v1244 = vunpack.c.h.b16 %v869
    %v1245 = vunpack.c.l.b16 %v870
    %v1246 = vunpack.c.h.b16 %v870
    %v1247 = vunpack.c.l.b16 %v871
    %v1248 = vunpack.c.h.b16 %v871
    %v1249 = vunpack.c.l.b16 %v872
    %v1250 = vunpack.c.h.b16 %v872
    %v1251 = vunpack.c.l.b16 %v873
    %v1252 = vunpack.c.h.b16 %v873
    %v1253 = vunpack.c.l.b16 %v874
    %v1254 = vunpack.c.h.b16 %v874
    %v1255 = vunpack.c.l.b16 %v875
    %v1256 = vunpack.c.h.b16 %v875
    %v1257 = vunpack.c.l.b16 %v876
    %v1258 = vunpack.c.h.b16 %v876
    %v1259 = vunpack.c.l.b16 %v877
    %v1260 = vunpack.c.h.b16 %v877
    %v1261 = vunpack.c.l.b16 %v878
    %v1262 = vunpack.c.h.b16 %v878
    %v1263 = vunpack.c.l.b16 %v879
    %v1264 = vunpack.c.h.b16 %v879
    %v1265 = vunpack.c.l.b16 %v880
    %v1266 = vunpack.c.h.b16 %v880
    %v1267 = vunpack.c.l.b16 %v881
    %v1268 = vunpack.c.h.b16 %v881
    %v1269 = vunpack.c.l.b16 %v882
    %v1270 = vunpack.c.h.b16 %v882
    %v1271 = vunpack.c.l.b16 %v883
    %v1272 = vunpack.c.h.b16 %v883
    %v1273 = vunpack.c.l.b16 %v884
    %v1274 = vunpack.c.h.b16 %v884
    %v1275 = vunpack.c.l.b16 %v885
    %v1276 = vunpack.c.h.b16 %v885
    %v1277 = vunpack.c.l.b16 %v886
    %v1278 = vunpack.c.h.b16 %v886
    %v1279 = vunpack.c.l.b16 %v887
    %v1280 = vunpack.c.h.b16 %v887
    %v1281 = vunpack.c.l.b16 %v888
    %v1282 = vunpack.c.h.b16 %v888
    %v1283 = vpack.c.b16 %v1031, %v1027
    %v1284 = vpack.c.b16 %v1032, %v1028
    %v1285 = vpack.c.b16 %v1033, %v1029
    %v1286 = vpack.c.b16 %v1034, %v1030
    %v1287 = vpack.c.b16 %v1039, %v1035
    %v1288 = vpack.c.b16 %v1040, %v1036
    %v1289 = vpack.c.b16 %v1041, %v1037
    %v1290 = vpack.c.b16 %v1042, %v1038
    %v1291 = vpack.c.b16 %v1047, %v1043
    %v1292 = vpack.c.b16 %v1048, %v1044
    %v1293 = vpack.c.b16 %v1049, %v1045
    %v1294 = vpack.c.b16 %v1050, %v1046
    %v1295 = vpack.c.b16 %v1055, %v1051
    %v1296 = vpack.c.b16 %v1056, %v1052
    %v1297 = vpack.c.b16 %v1057, %v1053
    %v1298 = vpack.c.b16 %v1058, %v1054
    %v1299 = vpack.c.b16 %v1063, %v1059
    %v1300 = vpack.c.b16 %v1064, %v1060
    %v1301 = vpack.c.b16 %v1065, %v1061
    %v1302 = vpack.c.b16 %v1066, %v1062
    %v1303 = vpack.c.b16 %v1071, %v1067
    %v1304 = vpack.c.b16 %v1072, %v1068
    %v1305 = vpack.c.b16 %v1073, %v1069
    %v1306 = vpack.c.b16 %v1074, %v1070
    %v1307 = vpack.c.b16 %v1079, %v1075
    %v1308 = vpack.c.b16 %v1080, %v1076
    %v1309 = vpack.c.b16 %v1081, %v1077
    %v1310 = vpack.c.b16 %v1082, %v1078
    %v1311 = vpack.c.b16 %v1087, %v1083
    %v1312 = vpack.c.b16 %v1088, %v1084
    %v1313 = vpack.c.b16 %v1089, %v1085
    %v1314 = vpack.c.b16 %v1090, %v1086
    %v1315 = vpack.c.b16 %v1095, %v1091
    %v1316 = vpack.c.b16 %v1096, %v1092
    %v1317 = vpack.c.b16 %v1097, %v1093
    %v1318 = vpack.c.b16 %v1098, %v1094
    %v1319 = vpack.c.b16 %v1103, %v1099
    %v1320 = vpack.c.b16 %v1104, %v1100
    %v1321 = vpack.c.b16 %v1105, %v1101
    %v1322 = vpack.c.b16 %v1106, %v1102
    %v1323 = vpack.c.b16 %v1111, %v1107
    %v1324 = vpack.c.b16 %v1112, %v1108
    %v1325 = vpack.c.b16 %v1113, %v1109
    %v1326 = vpack.c.b16 %v1114, %v1110
    %v1327 = vpack.c.b16 %v1119, %v1115
    %v1328 = vpack.c.b16 %v1120, %v1116
    %v1329 = vpack.c.b16 %v1121, %v1117
    %v1330 = vpack.c.b16 %v1122, %v1118
    %v1331 = vpack.c.b16 %v1127, %v1123
    %v1332 = vpack.c.b16 %v1128, %v1124
    %v1333 = vpack.c.b16 %v1129, %v1125
    %v1334 = vpack.c.b16 %v1130, %v1126
    %v1335 = vpack.c.b16 %v1135, %v1131
    %v1336 = vpack.c.b16 %v1136, %v1132
    %v1337 = vpack.c.b16 %v1137, %v1133
    %v1338 = vpack.c.b16 %v1138, %v1134
    %v1339 = vpack.c.b16 %v1143, %v1139
    %v1340 = vpack.c.b16 %v1144, %v1140
    %v1341 = vpack.c.b16 %v1145, %v1141
    %v1342 = vpack.c.b16 %v1146, %v1142
    %v1343 = vpack.c.b16 %v1151, %v1147
    %v1344 = vpack.c.b16 %v1152, %v1148
    %v1345 = vpack.c.b16 %v1153, %v1149
    %v1346 = vpack.c.b16 %v1154, %v1150
    %v1347 = vpack.c.b16 %v1159, %v1155
    %v1348 = vpack.c.b16 %v1160, %v1156
    %v1349 = vpack.c.b16 %v1161, %v1157
    %v1350 = vpack.c.b16 %v1162, %v1158
    %v1351 = vpack.c.b16 %v1167, %v1163
    %v1352 = vpack.c.b16 %v1168, %v1164
    %v1353 = vpack.c.b16 %v1169, %v1165
    %v1354 = vpack.c.b16 %v1170, %v1166
    %v1355 = vpack.c.b16 %v1175, %v1171
    %v1356 = vpack.c.b16 %v1176, %v1172
    %v1357 = vpack.c.b16 %v1177, %v1173
    %v1358 = vpack.c.b16 %v1178, %v1174
    %v1359 = vpack.c.b16 %v1183, %v1179
    %v1360 = vpack.c.b16 %v1184, %v1180
    %v1361 = vpack.c.b16 %v1185, %v1181
    %v1362 = vpack.c.b16 %v1186, %v1182
    %v1363 = vpack.c.b16 %v1191, %v1187
    %v1364 = vpack.c.b16 %v1192, %v1188
    %v1365 = vpack.c.b16 %v1193, %v1189
    %v1366 = vpack.c.b16 %v1194, %v1190
    %v1367 = vpack.c.b16 %v1199, %v1195
    %v1368 = vpack.c.b16 %v1200, %v1196
    %v1369 = vpack.c.b16 %v1201, %v1197
    %v1370 = vpack.c.b16 %v1202, %v1198
    %v1371 = vpack.c.b16 %v1207, %v1203
    %v1372 = vpack.c.b16 %v1208, %v1204
    %v1373 = vpack.c.b16 %v1209, %v1205
    %v1374 = vpack.c.b16 %v1210, %v1206
    %v1375 = vpack.c.b16 %v1215, %v1211
    %v1376 = vpack.c.b16 %v1216, %v1212
    %v1377 = vpack.c.b16 %v1217, %v1213
    %v1378 = vpack.c.b16 %v1218, %v1214
    %v1379 = vpack.c.b16 %v1223, %v1219
    %v1380 = vpack.c.b16 %v1224, %v1220
    %v1381 = vpack.c.b16 %v1225, %v1221
    %v1382 = vpack.c.b16 %v1226, %v1222
    %v1383 = vpack.c.b16 %v1231, %v1227
    %v1384 = vpack.c.b16 %v1232, %v1228
    %v1385 = vpack.c.b16 %v1233, %v1229
    %v1386 = vpack.c.b16 %v1234, %v1230
    %v1387 = vpack.c.b16 %v1239, %v1235
    %v1388 = vpack.c.b16 %v1240, %v1236
    %v1389 = vpack.c.b16 %v1241, %v1237
    %v1390 = vpack.c.b16 %v1242, %v1238
    %v1391 = vpack.c.b16 %v1247, %v1243
    %v1392 = vpack.c.b16 %v1248, %v1244
    %v1393 = vpack.c.b16 %v1249, %v1245
    %v1394 = vpack.c.b16 %v1250, %v1246
    %v1395 = vpack.c.b16 %v1255, %v1251
    %v1396 = vpack.c.b16 %v1256, %v1252
    %v1397 = vpack.c.b16 %v1257, %v1253
    %v1398 = vpack.c.b16 %v1258, %v1254
    %v1399 = vpack.c.b16 %v1263, %v1259
    %v1400 = vpack.c.b16 %v1264, %v1260
    %v1401 = vpack.c.b16 %v1265, %v1261
    %v1402 = vpack.c.b16 %v1266, %v1262
    %v1403 = vpack.c.b16 %v1271, %v1267
    %v1404 = vpack.c.b16 %v1272, %v1268
    %v1405 = vpack.c.b16 %v1273, %v1269
    %v1406 = vpack.c.b16 %v1274, %v1270
    %v1407 = vpack.c.b16 %v1279, %v1275
    %v1408 = vpack.c.b16 %v1280, %v1276
    %v1409 = vpack.c.b16 %v1281, %v1277
    %v1410 = vpack.c.b16 %v1282, %v1278
    %1539 = vmatpush.bf16.msra.mxu0 %v1311
    %1540 = vmatpush.bf16.msra.mxu0 %v1307
    %1541 = vmatpush.bf16.msra.mxu0 %v1303
    %1542 = vmatpush.bf16.msra.mxu0 %v1299
    %1543 = vmatpush.bf16.msra.mxu0 %v1295
    %1544 = vmatpush.bf16.msra.mxu0 %v1291
    %1545 = vmatpush.bf16.msra.mxu0 %v1287
    %1546 = vmatpush.bf16.msra.mxu0 %v1283
    %1547 = vmatmul.bf16.gmra.mxu0 %v757
    %v1548 = vpop.f32.mrf.mxu0
    %v1549 = vadd.f32 %v891, %v1548
    %v1550 = vpop.f32.mrf.mxu0
    %v1551 = vadd.f32 %v891, %v1550
    %1552 = vdwg.mxu0
    %1553 = vmatpush.bf16.msra.mxu0 %v1343
    %1554 = vmatpush.bf16.msra.mxu0 %v1339
    %1555 = vmatpush.bf16.msra.mxu0 %v1335
    %1556 = vmatpush.bf16.msra.mxu0 %v1331
    %1557 = vmatpush.bf16.msra.mxu0 %v1327
    %1558 = vmatpush.bf16.msra.mxu0 %v1323
    %1559 = vmatpush.bf16.msra.mxu0 %v1319
    %1560 = vmatpush.bf16.msra.mxu0 %v1315
    %1561 = vmatmul.bf16.gmra.mxu0 %v758
    %v1562 = vpop.f32.mrf.mxu0
    %v1563 = vadd.f32 %v1549, %v1562
    %v1564 = vpop.f32.mrf.mxu0
    %v1565 = vadd.f32 %v1551, %v1564
    %1566 = vdwg.mxu0
    %1567 = vmatpush.bf16.msra.mxu0 %v1375
    %1568 = vmatpush.bf16.msra.mxu0 %v1371
    %1569 = vmatpush.bf16.msra.mxu0 %v1367
    %1570 = vmatpush.bf16.msra.mxu0 %v1363
    %1571 = vmatpush.bf16.msra.mxu0 %v1359
    %1572 = vmatpush.bf16.msra.mxu0 %v1355
    %1573 = vmatpush.bf16.msra.mxu0 %v1351
    %1574 = vmatpush.bf16.msra.mxu0 %v1347
    %1575 = vmatmul.bf16.gmra.mxu0 %v759
    %v1576 = vpop.f32.mrf.mxu0
    %v1577 = vadd.f32 %v1563, %v1576
    %v1578 = vpop.f32.mrf.mxu0
    %v1579 = vadd.f32 %v1565, %v1578
    %1580 = vdwg.mxu0
    %1581 = vmatpush.bf16.msra.mxu0 %v1407
    %1582 = vmatpush.bf16.msra.mxu0 %v1403
    %1583 = vmatpush.bf16.msra.mxu0 %v1399
    %1584 = vmatpush.bf16.msra.mxu0 %v1395
    %1585 = vmatpush.bf16.msra.mxu0 %v1391
    %1586 = vmatpush.bf16.msra.mxu0 %v1387
    %1587 = vmatpush.bf16.msra.mxu0 %v1383
    %1588 = vmatpush.bf16.msra.mxu0 %v1379
    %1589 = vmatmul.bf16.gmra.mxu0 %v760
    %v1590 = vpop.f32.mrf.mxu0
    %v1591 = vadd.f32 %v1577, %v1590
    %v1592 = vpop.f32.mrf.mxu0
    %v1593 = vadd.f32 %v1579, %v1592
    %1594 = vdwg.mxu0
    %1595 = vmatpush.bf16.msra.mxu0 %v1312
    %1596 = vmatpush.bf16.msra.mxu0 %v1308
    %1597 = vmatpush.bf16.msra.mxu0 %v1304
    %1598 = vmatpush.bf16.msra.mxu0 %v1300
    %1599 = vmatpush.bf16.msra.mxu0 %v1296
    %1600 = vmatpush.bf16.msra.mxu0 %v1292
    %1601 = vmatpush.bf16.msra.mxu0 %v1288
    %1602 = vmatpush.bf16.msra.mxu0 %v1284
    %1603 = vmatmul.bf16.gmra.mxu0 %v757
    %v1604 = vpop.f32.mrf.mxu0
    %v1605 = vadd.f32 %v892, %v1604
    %v1606 = vpop.f32.mrf.mxu0
    %v1607 = vadd.f32 %v892, %v1606
    %1608 = vdwg.mxu0
    %1609 = vmatpush.bf16.msra.mxu0 %v1344
    %1610 = vmatpush.bf16.msra.mxu0 %v1340
    %1611 = vmatpush.bf16.msra.mxu0 %v1336
    %1612 = vmatpush.bf16.msra.mxu0 %v1332
    %1613 = vmatpush.bf16.msra.mxu0 %v1328
    %1614 = vmatpush.bf16.msra.mxu0 %v1324
    %1615 = vmatpush.bf16.msra.mxu0 %v1320
    %1616 = vmatpush.bf16.msra.mxu0 %v1316
    %1617 = vmatmul.bf16.gmra.mxu0 %v758
    %v1618 = vpop.f32.mrf.mxu0
    %v1619 = vadd.f32 %v1605, %v1618
    %v1620 = vpop.f32.mrf.mxu0
    %v1621 = vadd.f32 %v1607, %v1620
    %1622 = vdwg.mxu0
    %1623 = vmatpush.bf16.msra.mxu0 %v1376
    %1624 = vmatpush.bf16.msra.mxu0 %v1372
    %1625 = vmatpush.bf16.msra.mxu0 %v1368
    %1626 = vmatpush.bf16.msra.mxu0 %v1364
    %1627 = vmatpush.bf16.msra.mxu0 %v1360
    %1628 = vmatpush.bf16.msra.mxu0 %v1356
    %1629 = vmatpush.bf16.msra.mxu0 %v1352
    %1630 = vmatpush.bf16.msra.mxu0 %v1348
    %1631 = vmatmul.bf16.gmra.mxu0 %v759
    %v1632 = vpop.f32.mrf.mxu0
    %v1633 = vadd.f32 %v1619, %v1632
    %v1634 = vpop.f32.mrf.mxu0
    %v1635 = vadd.f32 %v1621, %v1634
    %1636 = vdwg.mxu0
    %1637 = vmatpush.bf16.msra.mxu0 %v1408
    %1638 = vmatpush.bf16.msra.mxu0 %v1404
    %1639 = vmatpush.bf16.msra.mxu0 %v1400
    %1640 = vmatpush.bf16.msra.mxu0 %v1396
    %1641 = vmatpush.bf16.msra.mxu0 %v1392
    %1642 = vmatpush.bf16.msra.mxu0 %v1388
    %1643 = vmatpush.bf16.msra.mxu0 %v1384
    %1644 = vmatpush.bf16.msra.mxu0 %v1380
    %1645 = vmatmul.bf16.gmra.mxu0 %v760
    %v1646 = vpop.f32.mrf.mxu0
    %v1647 = vadd.f32 %v1633, %v1646
    %v1648 = vpop.f32.mrf.mxu0
    %v1649 = vadd.f32 %v1635, %v1648
    %1650 = vdwg.mxu0
    %1651 = vmatpush.bf16.msra.mxu0 %v1313
    %1652 = vmatpush.bf16.msra.mxu0 %v1309
    %1653 = vmatpush.bf16.msra.mxu0 %v1305
    %1654 = vmatpush.bf16.msra.mxu0 %v1301
    %1655 = vmatpush.bf16.msra.mxu0 %v1297
    %1656 = vmatpush.bf16.msra.mxu0 %v1293
    %1657 = vmatpush.bf16.msra.mxu0 %v1289
    %1658 = vmatpush.bf16.msra.mxu0 %v1285
    %1659 = vmatmul.bf16.gmra.mxu0 %v757
    %v1660 = vpop.f32.mrf.mxu0
    %v1661 = vadd.f32 %v893, %v1660
    %v1662 = vpop.f32.mrf.mxu0
    %v1663 = vadd.f32 %v893, %v1662
    %1664 = vdwg.mxu0
    %1665 = vmatpush.bf16.msra.mxu0 %v1345
    %1666 = vmatpush.bf16.msra.mxu0 %v1341
    %1667 = vmatpush.bf16.msra.mxu0 %v1337
    %1668 = vmatpush.bf16.msra.mxu0 %v1333
    %1669 = vmatpush.bf16.msra.mxu0 %v1329
    %1670 = vmatpush.bf16.msra.mxu0 %v1325
    %1671 = vmatpush.bf16.msra.mxu0 %v1321
    %1672 = vmatpush.bf16.msra.mxu0 %v1317
    %1673 = vmatmul.bf16.gmra.mxu0 %v758
    %v1674 = vpop.f32.mrf.mxu0
    %v1675 = vadd.f32 %v1661, %v1674
    %v1676 = vpop.f32.mrf.mxu0
    %v1677 = vadd.f32 %v1663, %v1676
    %1678 = vdwg.mxu0
    %1679 = vmatpush.bf16.msra.mxu0 %v1377
    %1680 = vmatpush.bf16.msra.mxu0 %v1373
    %1681 = vmatpush.bf16.msra.mxu0 %v1369
    %1682 = vmatpush.bf16.msra.mxu0 %v1365
    %1683 = vmatpush.bf16.msra.mxu0 %v1361
    %1684 = vmatpush.bf16.msra.mxu0 %v1357
    %1685 = vmatpush.bf16.msra.mxu0 %v1353
    %1686 = vmatpush.bf16.msra.mxu0 %v1349
    %1687 = vmatmul.bf16.gmra.mxu0 %v759
    %v1688 = vpop.f32.mrf.mxu0
    %v1689 = vadd.f32 %v1675, %v1688
    %v1690 = vpop.f32.mrf.mxu0
    %v1691 = vadd.f32 %v1677, %v1690
    %1692 = vdwg.mxu0
    %1693 = vmatpush.bf16.msra.mxu0 %v1409
    %1694 = vmatpush.bf16.msra.mxu0 %v1405
    %1695 = vmatpush.bf16.msra.mxu0 %v1401
    %1696 = vmatpush.bf16.msra.mxu0 %v1397
    %1697 = vmatpush.bf16.msra.mxu0 %v1393
    %1698 = vmatpush.bf16.msra.mxu0 %v1389
    %1699 = vmatpush.bf16.msra.mxu0 %v1385
    %1700 = vmatpush.bf16.msra.mxu0 %v1381
    %1701 = vmatmul.bf16.gmra.mxu0 %v760
    %v1702 = vpop.f32.mrf.mxu0
    %v1703 = vadd.f32 %v1689, %v1702
    %v1704 = vpop.f32.mrf.mxu0
    %v1705 = vadd.f32 %v1691, %v1704
    %1706 = vdwg.mxu0
    %1707 = vmatpush.bf16.msra.mxu0 %v1314
    %1708 = vmatpush.bf16.msra.mxu0 %v1310
    %1709 = vmatpush.bf16.msra.mxu0 %v1306
    %1710 = vmatpush.bf16.msra.mxu0 %v1302
    %1711 = vmatpush.bf16.msra.mxu0 %v1298
    %1712 = vmatpush.bf16.msra.mxu0 %v1294
    %1713 = vmatpush.bf16.msra.mxu0 %v1290
    %1714 = vmatpush.bf16.msra.mxu0 %v1286
    %1715 = vmatmul.bf16.gmra.mxu0 %v757
    %v1716 = vpop.f32.mrf.mxu0
    %v1717 = vadd.f32 %v894, %v1716
    %v1718 = vpop.f32.mrf.mxu0
    %v1719 = vadd.f32 %v894, %v1718
    %1720 = vdwg.mxu0
    %1721 = vmatpush.bf16.msra.mxu0 %v1346
    %1722 = vmatpush.bf16.msra.mxu0 %v1342
    %1723 = vmatpush.bf16.msra.mxu0 %v1338
    %1724 = vmatpush.bf16.msra.mxu0 %v1334
    %1725 = vmatpush.bf16.msra.mxu0 %v1330
    %1726 = vmatpush.bf16.msra.mxu0 %v1326
    %1727 = vmatpush.bf16.msra.mxu0 %v1322
    %1728 = vmatpush.bf16.msra.mxu0 %v1318
    %1729 = vmatmul.bf16.gmra.mxu0 %v758
    %v1730 = vpop.f32.mrf.mxu0
    %v1731 = vadd.f32 %v1717, %v1730
    %v1732 = vpop.f32.mrf.mxu0
    %v1733 = vadd.f32 %v1719, %v1732
    %1734 = vdwg.mxu0
    %1735 = vmatpush.bf16.msra.mxu0 %v1378
    %1736 = vmatpush.bf16.msra.mxu0 %v1374
    %1737 = vmatpush.bf16.msra.mxu0 %v1370
    %1738 = vmatpush.bf16.msra.mxu0 %v1366
    %1739 = vmatpush.bf16.msra.mxu0 %v1362
    %1740 = vmatpush.bf16.msra.mxu0 %v1358
    %1741 = vmatpush.bf16.msra.mxu0 %v1354
    %1742 = vmatpush.bf16.msra.mxu0 %v1350
    %1743 = vmatmul.bf16.gmra.mxu0 %v759
    %v1744 = vpop.f32.mrf.mxu0
    %v1745 = vadd.f32 %v1731, %v1744
    %v1746 = vpop.f32.mrf.mxu0
    %v1747 = vadd.f32 %v1733, %v1746
    %1748 = vdwg.mxu0
    %1749 = vmatpush.bf16.msra.mxu0 %v1410
    %1750 = vmatpush.bf16.msra.mxu0 %v1406
    %1751 = vmatpush.bf16.msra.mxu0 %v1402
    %1752 = vmatpush.bf16.msra.mxu0 %v1398
    %1753 = vmatpush.bf16.msra.mxu0 %v1394
    %1754 = vmatpush.bf16.msra.mxu0 %v1390
    %1755 = vmatpush.bf16.msra.mxu0 %v1386
    %1756 = vmatpush.bf16.msra.mxu0 %v1382
    %1757 = vmatmul.bf16.gmra.mxu0 %v760
    %v1758 = vpop.f32.mrf.mxu0
    %v1759 = vadd.f32 %v1745, %v1758
    %v1760 = vpop.f32.mrf.mxu0
    %v1761 = vadd.f32 %v1747, %v1760
    %1762 = vdwg.mxu0
    %v1763 = vmax.f32 %v1591, 0.0
    %v1764 = vmax.f32 %v1647, 0.0
    %v1765 = vmax.f32 %v1703, 0.0
    %v1766 = vmax.f32 %v1759, 0.0
    %v1767 = vmax.f32 %v1593, 0.0
    %v1768 = vmax.f32 %v1649, 0.0
    %v1769 = vmax.f32 %v1705, 0.0
    %v1770 = vmax.f32 %v1761, 0.0
    %v1771 = vpack.c.bf16 %v1767, %v1763
    %v1772 = vpack.c.bf16 %v1768, %v1764
    %v1773 = vpack.c.bf16 %v1769, %v1765
    %v1774 = vpack.c.bf16 %v1770, %v1766
    %v1775 = vld [vmem:[#allocation7] sm:$0xff]
    %v1776 = vld [vmem:[#allocation7 + $0x8] sm:$0xff]
    %v1777 = vld [vmem:[#allocation7 + $0x10] sm:$0xff]
    %v1778 = vld [vmem:[#allocation7 + $0x18] sm:$0xff]
    %v1779 = vld [vmem:[#allocation7 + $0x20] sm:$0xff]
    %v1780 = vld [vmem:[#allocation7 + $0x28] sm:$0xff]
    %v1781 = vld [vmem:[#allocation7 + $0x30] sm:$0xff]
    %v1782 = vld [vmem:[#allocation7 + $0x38] sm:$0xff]
    %v1783 = vld [vmem:[#allocation7 + $0x40] sm:$0xff]
    %v1784 = vld [vmem:[#allocation7 + $0x48] sm:$0xff]
    %v1785 = vld [vmem:[#allocation7 + $0x50] sm:$0xff]
    %v1786 = vld [vmem:[#allocation7 + $0x58] sm:$0xff]
    %v1787 = vld [vmem:[#allocation7 + $0x60] sm:$0xff]
    %v1788 = vld [vmem:[#allocation7 + $0x68] sm:$0xff]
    %v1789 = vld [vmem:[#allocation7 + $0x70] sm:$0xff]
    %v1790 = vld [vmem:[#allocation7 + $0x78] sm:$0xff]
    %v1791 = vld [vmem:[#allocation7 + $0x80] sm:$0xff]
    %v1792 = vld [vmem:[#allocation7 + $0x88] sm:$0xff]
    %v1793 = vld [vmem:[#allocation7 + $0x90] sm:$0xff]
    %v1794 = vld [vmem:[#allocation7 + $0x98] sm:$0xff]
    %v1795 = vld [vmem:[#allocation7 + $0xa0] sm:$0xff]
    %v1796 = vld [vmem:[#allocation7 + $0xa8] sm:$0xff]
    %v1797 = vld [vmem:[#allocation7 + $0xb0] sm:$0xff]
    %v1798 = vld [vmem:[#allocation7 + $0xb8] sm:$0xff]
    %v1799 = vld [vmem:[#allocation7 + $0xc0] sm:$0xff]
    %v1800 = vld [vmem:[#allocation7 + $0xc8] sm:$0xff]
    %v1801 = vld [vmem:[#allocation7 + $0xd0] sm:$0xff]
    %v1802 = vld [vmem:[#allocation7 + $0xd8] sm:$0xff]
    %v1803 = vld [vmem:[#allocation7 + $0xe0] sm:$0xff]
    %v1804 = vld [vmem:[#allocation7 + $0xe8] sm:$0xff]
    %v1805 = vld [vmem:[#allocation7 + $0xf0] sm:$0xff]
    %v1806 = vld [vmem:[#allocation7 + $0xf8] sm:$0xff]
    %v1807 = vld [vmem:[#allocation7 + $0x100] sm:$0xff]
    %v1808 = vld [vmem:[#allocation7 + $0x108] sm:$0xff]
    %v1809 = vld [vmem:[#allocation7 + $0x110] sm:$0xff]
    %v1810 = vld [vmem:[#allocation7 + $0x118] sm:$0xff]
    %v1811 = vld [vmem:[#allocation7 + $0x120] sm:$0xff]
    %v1812 = vld [vmem:[#allocation7 + $0x128] sm:$0xff]
    %v1813 = vld [vmem:[#allocation7 + $0x130] sm:$0xff]
    %v1814 = vld [vmem:[#allocation7 + $0x138] sm:$0xff]
    %v1815 = vld [vmem:[#allocation7 + $0x140] sm:$0xff]
    %v1816 = vld [vmem:[#allocation7 + $0x148] sm:$0xff]
    %v1817 = vld [vmem:[#allocation7 + $0x150] sm:$0xff]
    %v1818 = vld [vmem:[#allocation7 + $0x158] sm:$0xff]
    %v1819 = vld [vmem:[#allocation7 + $0x160] sm:$0xff]
    %v1820 = vld [vmem:[#allocation7 + $0x168] sm:$0xff]
    %v1821 = vld [vmem:[#allocation7 + $0x170] sm:$0xff]
    %v1822 = vld [vmem:[#allocation7 + $0x178] sm:$0xff]
    %v1823 = vld [vmem:[#allocation7 + $0x180] sm:$0xff]
    %v1824 = vld [vmem:[#allocation7 + $0x188] sm:$0xff]
    %v1825 = vld [vmem:[#allocation7 + $0x190] sm:$0xff]
    %v1826 = vld [vmem:[#allocation7 + $0x198] sm:$0xff]
    %v1827 = vld [vmem:[#allocation7 + $0x1a0] sm:$0xff]
    %v1828 = vld [vmem:[#allocation7 + $0x1a8] sm:$0xff]
    %v1829 = vld [vmem:[#allocation7 + $0x1b0] sm:$0xff]
    %v1830 = vld [vmem:[#allocation7 + $0x1b8] sm:$0xff]
    %v1831 = vld [vmem:[#allocation7 + $0x1c0] sm:$0xff]
    %v1832 = vld [vmem:[#allocation7 + $0x1c8] sm:$0xff]
    %v1833 = vld [vmem:[#allocation7 + $0x1d0] sm:$0xff]
    %v1834 = vld [vmem:[#allocation7 + $0x1d8] sm:$0xff]
    %v1835 = vld [vmem:[#allocation7 + $0x1e0] sm:$0xff]
    %v1836 = vld [vmem:[#allocation7 + $0x1e8] sm:$0xff]
    %v1837 = vld [vmem:[#allocation7 + $0x1f0] sm:$0xff]
    %v1838 = vld [vmem:[#allocation7 + $0x1f8] sm:$0xff]
    %v1839 = vld [vmem:[%s6 + $0xa] sm:$0x3]
    %v1841 = vperm.slane %v1839, 0
    %v1842 = vperm.slane %v1839, 1
    %v1909 = vunpack.c.l.b16 %v1775
    %v1910 = vunpack.c.h.b16 %v1775
    %v1911 = vunpack.c.l.b16 %v1776
    %v1912 = vunpack.c.h.b16 %v1776
    %v1913 = vunpack.c.l.b16 %v1777
    %v1914 = vunpack.c.h.b16 %v1777
    %v1915 = vunpack.c.l.b16 %v1778
    %v1916 = vunpack.c.h.b16 %v1778
    %v1917 = vunpack.c.l.b16 %v1779
    %v1918 = vunpack.c.h.b16 %v1779
    %v1919 = vunpack.c.l.b16 %v1780
    %v1920 = vunpack.c.h.b16 %v1780
    %v1921 = vunpack.c.l.b16 %v1781
    %v1922 = vunpack.c.h.b16 %v1781
    %v1923 = vunpack.c.l.b16 %v1782
    %v1924 = vunpack.c.h.b16 %v1782
    %v1925 = vunpack.c.l.b16 %v1783
    %v1926 = vunpack.c.h.b16 %v1783
    %v1927 = vunpack.c.l.b16 %v1784
    %v1928 = vunpack.c.h.b16 %v1784
    %v1929 = vunpack.c.l.b16 %v1785
    %v1930 = vunpack.c.h.b16 %v1785
    %v1931 = vunpack.c.l.b16 %v1786
    %v1932 = vunpack.c.h.b16 %v1786
    %v1933 = vunpack.c.l.b16 %v1787
    %v1934 = vunpack.c.h.b16 %v1787
    %v1935 = vunpack.c.l.b16 %v1788
    %v1936 = vunpack.c.h.b16 %v1788
    %v1937 = vunpack.c.l.b16 %v1789
    %v1938 = vunpack.c.h.b16 %v1789
    %v1939 = vunpack.c.l.b16 %v1790
    %v1940 = vunpack.c.h.b16 %v1790
    %v1941 = vunpack.c.l.b16 %v1791
    %v1942 = vunpack.c.h.b16 %v1791
    %v1943 = vunpack.c.l.b16 %v1792
    %v1944 = vunpack.c.h.b16 %v1792
    %v1945 = vunpack.c.l.b16 %v1793
    %v1946 = vunpack.c.h.b16 %v1793
    %v1947 = vunpack.c.l.b16 %v1794
    %v1948 = vunpack.c.h.b16 %v1794
    %v1949 = vunpack.c.l.b16 %v1795
    %v1950 = vunpack.c.h.b16 %v1795
    %v1951 = vunpack.c.l.b16 %v1796
    %v1952 = vunpack.c.h.b16 %v1796
    %v1953 = vunpack.c.l.b16 %v1797
    %v1954 = vunpack.c.h.b16 %v1797
    %v1955 = vunpack.c.l.b16 %v1798
    %v1956 = vunpack.c.h.b16 %v1798
    %v1957 = vunpack.c.l.b16 %v1799
    %v1958 = vunpack.c.h.b16 %v1799
    %v1959 = vunpack.c.l.b16 %v1800
    %v1960 = vunpack.c.h.b16 %v1800
    %v1961 = vunpack.c.l.b16 %v1801
    %v1962 = vunpack.c.h.b16 %v1801
    %v1963 = vunpack.c.l.b16 %v1802
    %v1964 = vunpack.c.h.b16 %v1802
    %v1965 = vunpack.c.l.b16 %v1803
    %v1966 = vunpack.c.h.b16 %v1803
    %v1967 = vunpack.c.l.b16 %v1804
    %v1968 = vunpack.c.h.b16 %v1804
    %v1969 = vunpack.c.l.b16 %v1805
    %v1970 = vunpack.c.h.b16 %v1805
    %v1971 = vunpack.c.l.b16 %v1806
    %v1972 = vunpack.c.h.b16 %v1806
    %v1973 = vunpack.c.l.b16 %v1807
    %v1974 = vunpack.c.h.b16 %v1807
    %v1975 = vunpack.c.l.b16 %v1808
    %v1976 = vunpack.c.h.b16 %v1808
    %v1977 = vunpack.c.l.b16 %v1809
    %v1978 = vunpack.c.h.b16 %v1809
    %v1979 = vunpack.c.l.b16 %v1810
    %v1980 = vunpack.c.h.b16 %v1810
    %v1981 = vunpack.c.l.b16 %v1811
    %v1982 = vunpack.c.h.b16 %v1811
    %v1983 = vunpack.c.l.b16 %v1812
    %v1984 = vunpack.c.h.b16 %v1812
    %v1985 = vunpack.c.l.b16 %v1813
    %v1986 = vunpack.c.h.b16 %v1813
    %v1987 = vunpack.c.l.b16 %v1814
    %v1988 = vunpack.c.h.b16 %v1814
    %v1989 = vunpack.c.l.b16 %v1815
    %v1990 = vunpack.c.h.b16 %v1815
    %v1991 = vunpack.c.l.b16 %v1816
    %v1992 = vunpack.c.h.b16 %v1816
    %v1993 = vunpack.c.l.b16 %v1817
    %v1994 = vunpack.c.h.b16 %v1817
    %v1995 = vunpack.c.l.b16 %v1818
    %v1996 = vunpack.c.h.b16 %v1818
    %v1997 = vunpack.c.l.b16 %v1819
    %v1998 = vunpack.c.h.b16 %v1819
    %v1999 = vunpack.c.l.b16 %v1820
    %v2000 = vunpack.c.h.b16 %v1820
    %v2001 = vunpack.c.l.b16 %v1821
    %v2002 = vunpack.c.h.b16 %v1821
    %v2003 = vunpack.c.l.b16 %v1822
    %v2004 = vunpack.c.h.b16 %v1822
    %v2005 = vunpack.c.l.b16 %v1823
    %v2006 = vunpack.c.h.b16 %v1823
    %v2007 = vunpack.c.l.b16 %v1824
    %v2008 = vunpack.c.h.b16 %v1824
    %v2009 = vunpack.c.l.b16 %v1825
    %v2010 = vunpack.c.h.b16 %v1825
    %v2011 = vunpack.c.l.b16 %v1826
    %v2012 = vunpack.c.h.b16 %v1826
    %v2013 = vunpack.c.l.b16 %v1827
    %v2014 = vunpack.c.h.b16 %v1827
    %v2015 = vunpack.c.l.b16 %v1828
    %v2016 = vunpack.c.h.b16 %v1828
    %v2017 = vunpack.c.l.b16 %v1829
    %v2018 = vunpack.c.h.b16 %v1829
    %v2019 = vunpack.c.l.b16 %v1830
    %v2020 = vunpack.c.h.b16 %v1830
    %v2021 = vunpack.c.l.b16 %v1831
    %v2022 = vunpack.c.h.b16 %v1831
    %v2023 = vunpack.c.l.b16 %v1832
    %v2024 = vunpack.c.h.b16 %v1832
    %v2025 = vunpack.c.l.b16 %v1833
    %v2026 = vunpack.c.h.b16 %v1833
    %v2027 = vunpack.c.l.b16 %v1834
    %v2028 = vunpack.c.h.b16 %v1834
    %v2029 = vunpack.c.l.b16 %v1835
    %v2030 = vunpack.c.h.b16 %v1835
    %v2031 = vunpack.c.l.b16 %v1836
    %v2032 = vunpack.c.h.b16 %v1836
    %v2033 = vunpack.c.l.b16 %v1837
    %v2034 = vunpack.c.h.b16 %v1837
    %v2035 = vunpack.c.l.b16 %v1838
    %v2036 = vunpack.c.h.b16 %v1838
    %v2037 = vpack.c.b16 %v1911, %v1909
    %v2038 = vpack.c.b16 %v1912, %v1910
    %v2039 = vpack.c.b16 %v1915, %v1913
    %v2040 = vpack.c.b16 %v1916, %v1914
    %v2041 = vpack.c.b16 %v1919, %v1917
    %v2042 = vpack.c.b16 %v1920, %v1918
    %v2043 = vpack.c.b16 %v1923, %v1921
    %v2044 = vpack.c.b16 %v1924, %v1922
    %v2045 = vpack.c.b16 %v1927, %v1925
    %v2046 = vpack.c.b16 %v1928, %v1926
    %v2047 = vpack.c.b16 %v1931, %v1929
    %v2048 = vpack.c.b16 %v1932, %v1930
    %v2049 = vpack.c.b16 %v1935, %v1933
    %v2050 = vpack.c.b16 %v1936, %v1934
    %v2051 = vpack.c.b16 %v1939, %v1937
    %v2052 = vpack.c.b16 %v1940, %v1938
    %v2053 = vpack.c.b16 %v1943, %v1941
    %v2054 = vpack.c.b16 %v1944, %v1942
    %v2055 = vpack.c.b16 %v1947, %v1945
    %v2056 = vpack.c.b16 %v1948, %v1946
    %v2057 = vpack.c.b16 %v1951, %v1949
    %v2058 = vpack.c.b16 %v1952, %v1950
    %v2059 = vpack.c.b16 %v1955, %v1953
    %v2060 = vpack.c.b16 %v1956, %v1954
    %v2061 = vpack.c.b16 %v1959, %v1957
    %v2062 = vpack.c.b16 %v1960, %v1958
    %v2063 = vpack.c.b16 %v1963, %v1961
    %v2064 = vpack.c.b16 %v1964, %v1962
    %v2065 = vpack.c.b16 %v1967, %v1965
    %v2066 = vpack.c.b16 %v1968, %v1966
    %v2067 = vpack.c.b16 %v1971, %v1969
    %v2068 = vpack.c.b16 %v1972, %v1970
    %v2069 = vpack.c.b16 %v1975, %v1973
    %v2070 = vpack.c.b16 %v1976, %v1974
    %v2071 = vpack.c.b16 %v1979, %v1977
    %v2072 = vpack.c.b16 %v1980, %v1978
    %v2073 = vpack.c.b16 %v1983, %v1981
    %v2074 = vpack.c.b16 %v1984, %v1982
    %v2075 = vpack.c.b16 %v1987, %v1985
    %v2076 = vpack.c.b16 %v1988, %v1986
    %v2077 = vpack.c.b16 %v1991, %v1989
    %v2078 = vpack.c.b16 %v1992, %v1990
    %v2079 = vpack.c.b16 %v1995, %v1993
    %v2080 = vpack.c.b16 %v1996, %v1994
    %v2081 = vpack.c.b16 %v1999, %v1997
    %v2082 = vpack.c.b16 %v2000, %v1998
    %v2083 = vpack.c.b16 %v2003, %v2001
    %v2084 = vpack.c.b16 %v2004, %v2002
    %v2085 = vpack.c.b16 %v2007, %v2005
    %v2086 = vpack.c.b16 %v2008, %v2006
    %v2087 = vpack.c.b16 %v2011, %v2009
    %v2088 = vpack.c.b16 %v2012, %v2010
    %v2089 = vpack.c.b16 %v2015, %v2013
    %v2090 = vpack.c.b16 %v2016, %v2014
    %v2091 = vpack.c.b16 %v2019, %v2017
    %v2092 = vpack.c.b16 %v2020, %v2018
    %v2093 = vpack.c.b16 %v2023, %v2021
    %v2094 = vpack.c.b16 %v2024, %v2022
    %v2095 = vpack.c.b16 %v2027, %v2025
    %v2096 = vpack.c.b16 %v2028, %v2026
    %v2097 = vpack.c.b16 %v2031, %v2029
    %v2098 = vpack.c.b16 %v2032, %v2030
    %v2099 = vpack.c.b16 %v2035, %v2033
    %v2100 = vpack.c.b16 %v2036, %v2034
    %2165 = vmatpush.bf16.msra.mxu0 %v2051
    %2166 = vmatpush.bf16.msra.mxu0 %v2049
    %2167 = vmatpush.bf16.msra.mxu0 %v2047
    %2168 = vmatpush.bf16.msra.mxu0 %v2045
    %2169 = vmatpush.bf16.msra.mxu0 %v2043
    %2170 = vmatpush.bf16.msra.mxu0 %v2041
    %2171 = vmatpush.bf16.msra.mxu0 %v2039
    %2172 = vmatpush.bf16.msra.mxu0 %v2037
    %2173 = vmatmul.bf16.gmra.mxu0 %v1771
    %v2174 = vpop.f32.mrf.mxu0
    %v2175 = vadd.f32 %v1841, %v2174
    %v2176 = vpop.f32.mrf.mxu0
    %v2177 = vadd.f32 %v1841, %v2176
    %2178 = vdwg.mxu0
    %2179 = vmatpush.bf16.msra.mxu0 %v2067
    %2180 = vmatpush.bf16.msra.mxu0 %v2065
    %2181 = vmatpush.bf16.msra.mxu0 %v2063
    %2182 = vmatpush.bf16.msra.mxu0 %v2061
    %2183 = vmatpush.bf16.msra.mxu0 %v2059
    %2184 = vmatpush.bf16.msra.mxu0 %v2057
    %2185 = vmatpush.bf16.msra.mxu0 %v2055
    %2186 = vmatpush.bf16.msra.mxu0 %v2053
    %2187 = vmatmul.bf16.gmra.mxu0 %v1772
    %v2188 = vpop.f32.mrf.mxu0
    %v2189 = vadd.f32 %v2175, %v2188
    %v2190 = vpop.f32.mrf.mxu0
    %v2191 = vadd.f32 %v2177, %v2190
    %2192 = vdwg.mxu0
    %2193 = vmatpush.bf16.msra.mxu0 %v2083
    %2194 = vmatpush.bf16.msra.mxu0 %v2081
    %2195 = vmatpush.bf16.msra.mxu0 %v2079
    %2196 = vmatpush.bf16.msra.mxu0 %v2077
    %2197 = vmatpush.bf16.msra.mxu0 %v2075
    %2198 = vmatpush.bf16.msra.mxu0 %v2073
    %2199 = vmatpush.bf16.msra.mxu0 %v2071
    %2200 = vmatpush.bf16.msra.mxu0 %v2069
    %2201 = vmatmul.bf16.gmra.mxu0 %v1773
    %v2202 = vpop.f32.mrf.mxu0
    %v2203 = vadd.f32 %v2189, %v2202
    %v2204 = vpop.f32.mrf.mxu0
    %v2205 = vadd.f32 %v2191, %v2204
    %2206 = vdwg.mxu0
    %2207 = vmatpush.bf16.msra.mxu0 %v2099
    %2208 = vmatpush.bf16.msra.mxu0 %v2097
    %2209 = vmatpush.bf16.msra.mxu0 %v2095
    %2210 = vmatpush.bf16.msra.mxu0 %v2093
    %2211 = vmatpush.bf16.msra.mxu0 %v2091
    %2212 = vmatpush.bf16.msra.mxu0 %v2089
    %2213 = vmatpush.bf16.msra.mxu0 %v2087
    %2214 = vmatpush.bf16.msra.mxu0 %v2085
    %2215 = vmatmul.bf16.gmra.mxu0 %v1774
    %v2216 = vpop.f32.mrf.mxu0
    %v2217 = vadd.f32 %v2203, %v2216
    %v2218 = vpop.f32.mrf.mxu0
    %v2219 = vadd.f32 %v2205, %v2218
    %2220 = vdwg.mxu0
    %2221 = vmatpush.bf16.msra.mxu0 %v2052
    %2222 = vmatpush.bf16.msra.mxu0 %v2050
    %2223 = vmatpush.bf16.msra.mxu0 %v2048
    %2224 = vmatpush.bf16.msra.mxu0 %v2046
    %2225 = vmatpush.bf16.msra.mxu0 %v2044
    %2226 = vmatpush.bf16.msra.mxu0 %v2042
    %2227 = vmatpush.bf16.msra.mxu0 %v2040
    %2228 = vmatpush.bf16.msra.mxu0 %v2038
    %2229 = vmatmul.bf16.gmra.mxu0 %v1771
    %v2230 = vpop.f32.mrf.mxu0
    %v2231 = vadd.f32 %v1842, %v2230
    %v2232 = vpop.f32.mrf.mxu0
    %v2233 = vadd.f32 %v1842, %v2232
    %2234 = vdwg.mxu0
    %2235 = vmatpush.bf16.msra.mxu0 %v2068
    %2236 = vmatpush.bf16.msra.mxu0 %v2066
    %2237 = vmatpush.bf16.msra.mxu0 %v2064
    %2238 = vmatpush.bf16.msra.mxu0 %v2062
    %2239 = vmatpush.bf16.msra.mxu0 %v2060
    %2240 = vmatpush.bf16.msra.mxu0 %v2058
    %2241 = vmatpush.bf16.msra.mxu0 %v2056
    %2242 = vmatpush.bf16.msra.mxu0 %v2054
    %2243 = vmatmul.bf16.gmra.mxu0 %v1772
    %v2244 = vpop.f32.mrf.mxu0
    %v2245 = vadd.f32 %v2231, %v2244
    %v2246 = vpop.f32.mrf.mxu0
    %v2247 = vadd.f32 %v2233, %v2246
    %2248 = vdwg.mxu0
    %2249 = vmatpush.bf16.msra.mxu0 %v2084
    %2250 = vmatpush.bf16.msra.mxu0 %v2082
    %2251 = vmatpush.bf16.msra.mxu0 %v2080
    %2252 = vmatpush.bf16.msra.mxu0 %v2078
    %2253 = vmatpush.bf16.msra.mxu0 %v2076
    %2254 = vmatpush.bf16.msra.mxu0 %v2074
    %2255 = vmatpush.bf16.msra.mxu0 %v2072
    %2256 = vmatpush.bf16.msra.mxu0 %v2070
    %2257 = vmatmul.bf16.gmra.mxu0 %v1773
    %v2258 = vpop.f32.mrf.mxu0
    %v2259 = vadd.f32 %v2245, %v2258
    %v2260 = vpop.f32.mrf.mxu0
    %v2261 = vadd.f32 %v2247, %v2260
    %2262 = vdwg.mxu0
    %2263 = vmatpush.bf16.msra.mxu0 %v2100
    %2264 = vmatpush.bf16.msra.mxu0 %v2098
    %2265 = vmatpush.bf16.msra.mxu0 %v2096
    %2266 = vmatpush.bf16.msra.mxu0 %v2094
    %2267 = vmatpush.bf16.msra.mxu0 %v2092
    %2268 = vmatpush.bf16.msra.mxu0 %v2090
    %2269 = vmatpush.bf16.msra.mxu0 %v2088
    %2270 = vmatpush.bf16.msra.mxu0 %v2086
    %2271 = vmatmul.bf16.gmra.mxu0 %v1774
    %v2272 = vpop.f32.mrf.mxu0
    %v2273 = vadd.f32 %v2259, %v2272
    %v2274 = vpop.f32.mrf.mxu0
    %v2275 = vadd.f32 %v2261, %v2274
    %2276 = vdwg.mxu0
    %v2277 = vmax.f32 %v2217, 0.0
    %v2278 = vmax.f32 %v2273, 0.0
    %v2279 = vmax.f32 %v2219, 0.0
    %v2280 = vmax.f32 %v2275, 0.0
    %v2281 = vpack.c.bf16 %v2279, %v2277
    %v2282 = vpack.c.bf16 %v2280, %v2278
    %v2283 = vld [vmem:[#allocation9] sm:$0xf]
    %v2284 = vld [vmem:[#allocation9 + $0x4] sm:$0xf]
    %v2285 = vld [vmem:[#allocation9 + $0x8] sm:$0xf]
    %v2286 = vld [vmem:[#allocation9 + $0xc] sm:$0xf]
    %v2287 = vld [vmem:[#allocation9 + $0x10] sm:$0xf]
    %v2288 = vld [vmem:[#allocation9 + $0x14] sm:$0xf]
    %v2289 = vld [vmem:[#allocation9 + $0x18] sm:$0xf]
    %v2290 = vld [vmem:[#allocation9 + $0x1c] sm:$0xf]
    %v2291 = vld [vmem:[#allocation9 + $0x20] sm:$0xf]
    %v2292 = vld [vmem:[#allocation9 + $0x24] sm:$0xf]
    %v2293 = vld [vmem:[#allocation9 + $0x28] sm:$0xf]
    %v2294 = vld [vmem:[#allocation9 + $0x2c] sm:$0xf]
    %v2295 = vld [vmem:[#allocation9 + $0x30] sm:$0xf]
    %v2296 = vld [vmem:[#allocation9 + $0x34] sm:$0xf]
    %v2297 = vld [vmem:[#allocation9 + $0x38] sm:$0xf]
    %v2298 = vld [vmem:[#allocation9 + $0x3c] sm:$0xf]
    %v2299 = vld [vmem:[#allocation9 + $0x40] sm:$0xf]
    %v2300 = vld [vmem:[#allocation9 + $0x44] sm:$0xf]
    %v2301 = vld [vmem:[#allocation9 + $0x48] sm:$0xf]
    %v2302 = vld [vmem:[#allocation9 + $0x4c] sm:$0xf]
    %v2303 = vld [vmem:[#allocation9 + $0x50] sm:$0xf]
    %v2304 = vld [vmem:[#allocation9 + $0x54] sm:$0xf]
    %v2305 = vld [vmem:[#allocation9 + $0x58] sm:$0xf]
    %v2306 = vld [vmem:[#allocation9 + $0x5c] sm:$0xf]
    %v2307 = vld [vmem:[#allocation9 + $0x60] sm:$0xf]
    %v2308 = vld [vmem:[#allocation9 + $0x64] sm:$0xf]
    %v2309 = vld [vmem:[#allocation9 + $0x68] sm:$0xf]
    %v2310 = vld [vmem:[#allocation9 + $0x6c] sm:$0xf]
    %v2311 = vld [vmem:[#allocation9 + $0x70] sm:$0xf]
    %v2312 = vld [vmem:[#allocation9 + $0x74] sm:$0xf]
    %v2313 = vld [vmem:[#allocation9 + $0x78] sm:$0xf]
    %v2314 = vld [vmem:[#allocation9 + $0x7c] sm:$0xf]
    %v2315 = vld [vmem:[%s6 + $0xc] sm:$0x1]
    %v2317 = vperm.slane %v2315, 0
    %v2351 = vunpack.c.l.b16 %v2283
    %v2352 = vunpack.c.l.b16 %v2284
    %v2353 = vunpack.c.l.b16 %v2285
    %v2354 = vunpack.c.l.b16 %v2286
    %v2355 = vunpack.c.l.b16 %v2287
    %v2356 = vunpack.c.l.b16 %v2288
    %v2357 = vunpack.c.l.b16 %v2289
    %v2358 = vunpack.c.l.b16 %v2290
    %v2359 = vunpack.c.l.b16 %v2291
    %v2360 = vunpack.c.l.b16 %v2292
    %v2361 = vunpack.c.l.b16 %v2293
    %v2362 = vunpack.c.l.b16 %v2294
    %v2363 = vunpack.c.l.b16 %v2295
    %v2364 = vunpack.c.l.b16 %v2296
    %v2365 = vunpack.c.l.b16 %v2297
    %v2366 = vunpack.c.l.b16 %v2298
    %v2367 = vunpack.c.l.b16 %v2299
    %v2368 = vunpack.c.l.b16 %v2300
    %v2369 = vunpack.c.l.b16 %v2301
    %v2370 = vunpack.c.l.b16 %v2302
    %v2371 = vunpack.c.l.b16 %v2303
    %v2372 = vunpack.c.l.b16 %v2304
    %v2373 = vunpack.c.l.b16 %v2305
    %v2374 = vunpack.c.l.b16 %v2306
    %v2375 = vunpack.c.l.b16 %v2307
    %v2376 = vunpack.c.l.b16 %v2308
    %v2377 = vunpack.c.l.b16 %v2309
    %v2378 = vunpack.c.l.b16 %v2310
    %v2379 = vunpack.c.l.b16 %v2311
    %v2380 = vunpack.c.l.b16 %v2312
    %v2381 = vunpack.c.l.b16 %v2313
    %v2382 = vunpack.c.l.b16 %v2314
    %v2383 = vpack.c.b16 %v2352, %v2351
    %v2384 = vpack.c.b16 %v2354, %v2353
    %v2385 = vpack.c.b16 %v2356, %v2355
    %v2386 = vpack.c.b16 %v2358, %v2357
    %v2387 = vpack.c.b16 %v2360, %v2359
    %v2388 = vpack.c.b16 %v2362, %v2361
    %v2389 = vpack.c.b16 %v2364, %v2363
    %v2390 = vpack.c.b16 %v2366, %v2365
    %v2391 = vpack.c.b16 %v2368, %v2367
    %v2392 = vpack.c.b16 %v2370, %v2369
    %v2393 = vpack.c.b16 %v2372, %v2371
    %v2394 = vpack.c.b16 %v2374, %v2373
    %v2395 = vpack.c.b16 %v2376, %v2375
    %v2396 = vpack.c.b16 %v2378, %v2377
    %v2397 = vpack.c.b16 %v2380, %v2379
    %v2398 = vpack.c.b16 %v2382, %v2381
    %2415 = vmatpush.bf16.msra.mxu0 %v2390
    %2416 = vmatpush.bf16.msra.mxu0 %v2389
    %2417 = vmatpush.bf16.msra.mxu0 %v2388
    %2418 = vmatpush.bf16.msra.mxu0 %v2387
    %2419 = vmatpush.bf16.msra.mxu0 %v2386
    %2420 = vmatpush.bf16.msra.mxu0 %v2385
    %2421 = vmatpush.bf16.msra.mxu0 %v2384
    %2422 = vmatpush.bf16.msra.mxu0 %v2383
    %2423 = vmatmul.bf16.gmra.mxu0 %v2281
    %v2424 = vpop.f32.mrf.mxu0
    %v2425 = vadd.f32 %v2317, %v2424
    %v2426 = vpop.f32.mrf.mxu0
    %v2427 = vadd.f32 %v2317, %v2426
    %2428 = vdwg.mxu0
    %2429 = vmatpush.bf16.msra.mxu0 %v2398
    %2430 = vmatpush.bf16.msra.mxu0 %v2397
    %2431 = vmatpush.bf16.msra.mxu0 %v2396
    %2432 = vmatpush.bf16.msra.mxu0 %v2395
    %2433 = vmatpush.bf16.msra.mxu0 %v2394
    %2434 = vmatpush.bf16.msra.mxu0 %v2393
    %2435 = vmatpush.bf16.msra.mxu0 %v2392
    %2436 = vmatpush.bf16.msra.mxu0 %v2391
    %2437 = vmatmul.bf16.gmra.mxu0 %v2282
    %v2438 = vpop.f32.mrf.mxu0
    %v2439 = vadd.f32 %v2425, %v2438
    %v2440 = vpop.f32.mrf.mxu0
    %v2441 = vadd.f32 %v2427, %v2440
    %2442 = vdwg.mxu0
    %2443 = vst [vmem:[%s7] sm:$0xff] %v2439
    %2444 = vst [vmem:[%s7 + $0x8] sm:$0xff] %v2441
    // Predicated region
    $region50: #{_lambda_.1} parent=1 // pred_check
      _
    $region51: #{_lambda_.1} parent=1 // pred_check_branch
      %2446 = sbr.rel (0) target = $region53
    $region52: #{_lambda_.1} parent=1 // pred_region
      _
    $region53: #{_lambda_.1} parent=1 // pred_fallthru
      _
    // Predicated region
    $region54: #{_lambda_.1} parent=1 // pred_check
      _
    $region55: #{_lambda_.1} parent=1 // pred_check_branch
      %2448 = sbr.rel (0) target = $region57
    $region56: #{_lambda_.1} parent=1 // pred_region
      _
    $region57: #{_lambda_.1} parent=1 // pred_fallthru
      _
    %2449 = vsyncpa [#allocation3], 1
    %2450 = vsyncpa [#allocation5], 1
    %2451 = vsyncpa [#allocation8], 1

</llo_original>
